<compile_context>
chip_gen: v7x
topology: tpu7x:2x2x1
jax: 0.10.0
libtpu: 0.0.40
codegen_flags: <defaults>
</compile_context>

<pallas_src>
import math

import jax
import jax.numpy as jnp
from jax.experimental import pallas as pl
from jax.experimental.pallas import tpu as pltpu

# ---- model dims (small, consistent with the module's config fields) ----
BATCH = 2
SEQ = 8
HIDDEN = 32
NUM_HEADS = 4
HEAD_DIM = HIDDEN // NUM_HEADS
INTERMEDIATE = 64
LN_EPS = 1e-5

ROWS = BATCH * SEQ                       # flattened (B*S) row axis
BIAS_LEN = 3 * HIDDEN + HIDDEN + INTERMEDIATE + HIDDEN   # qkv | out | ffn1 | ffn2


def _layer_norm(x, gamma, beta):
    # x: [R, H], gamma/beta: [1, H]
    mean = jnp.mean(x, axis=-1, keepdims=True)
    var = jnp.mean((x - mean) ** 2, axis=-1, keepdims=True)
    inv = jax.lax.rsqrt(var + LN_EPS)
    return (x - mean) * inv * gamma + beta


def _softmax_last(x):
    m = jnp.max(x, axis=-1, keepdims=True)
    e = jnp.exp(x - m)
    # EUP approximate reciprocal: keeps the normalisation off the VALU path.
    return e * pl.reciprocal(jnp.sum(e, axis=-1, keepdims=True), approx=True)


def _gelu_exact(x):
    # nn.GELU() default: 0.5 * x * (1 + erf(x / sqrt(2)))
    return 0.5 * x * (1.0 + jax.lax.erf(x * (1.0 / math.sqrt(2.0))))


def encoder_layer_kernel(
    x_ref,      # [R, H]
    ln_ref,     # [4, H]            rows: ln1_g, ln1_b, ln2_g, ln2_b
    wqkv_ref,   # [H, 3H]           q(scale folded) | k | v, lane-dense
    wo_ref,     # [H, H]
    w1_ref,     # [H, F]
    w2_ref,     # [F, H]
    b_ref,      # [1, 3H + H + F + H]   packed: bqkv | bo | b1 | b2
    mask_ref,   # [R, R]            additive block-diagonal batch mask (0 / -1e30)
    o_ref,      # [R, H]
):
    x = x_ref[...]                                                   # [R, H]

    # ---- LayerNorm 1 ----
    h1 = _layer_norm(x, ln_ref[0:1, :], ln_ref[1:2, :])              # [R, H]

    # ---- fused QKV: single lane-dense matmul (scale already folded into q) ----
    qkv = jnp.dot(h1, wqkv_ref[...],
                  preferred_element_type=jnp.float32) + b_ref[:, 0:3 * HIDDEN]  # [R, 3H]

    mask = mask_ref[...]                                             # [R, R]
    wo = wo_ref[...]                                                 # [H, H]

    # ---- per-head attention via static lane slices (unrolled, no 3-D temps) ----
    attn_acc = None
    for h in range(NUM_HEADS):
        lo = h * HEAD_DIM
        q_h = qkv[:, lo:lo + HEAD_DIM]                               # [R, dh]
        k_h = qkv[:, HIDDEN + lo:HIDDEN + lo + HEAD_DIM]             # [R, dh]
        v_h = qkv[:, 2 * HIDDEN + lo:2 * HIDDEN + lo + HEAD_DIM]     # [R, dh]
        # q_h @ k_h^T (contract last dims of both operands)
        s = jax.lax.dot_general(q_h, k_h, (((1,), (1,)), ((), ())),
                                preferred_element_type=jnp.float32) + mask   # [R, R]
        a = _softmax_last(s)
        ctx_h = jnp.dot(a, v_h, preferred_element_type=jnp.float32)  # [R, dh]
        # folded head-sum of the output projection (no concat, no [NH,R,H] slab)
        part = jnp.dot(ctx_h, wo[lo:lo + HEAD_DIM, :],
                       preferred_element_type=jnp.float32)           # [R, H]
        attn_acc = part if attn_acc is None else attn_acc + part

    off = 3 * HIDDEN
    x1 = x + attn_acc + b_ref[:, off:off + HIDDEN]                   # residual 1
    off += HIDDEN

    # ---- LayerNorm 2 + FeedForward ----
    h2 = _layer_norm(x1, ln_ref[2:3, :], ln_ref[3:4, :])
    f = jnp.dot(h2, w1_ref[...], preferred_element_type=jnp.float32) \
        + b_ref[:, off:off + INTERMEDIATE]
    f = _gelu_exact(f)
    off += INTERMEDIATE
    f = jnp.dot(f, w2_ref[...], preferred_element_type=jnp.float32) \
        + b_ref[:, off:off + HIDDEN]

    o_ref[...] = x1 + f


def transformer_encoder_layer(x, params):
    B, S, H = x.shape
    R = B * S
    scale = 1.0 / math.sqrt(HEAD_DIM)

    # ---- parameter fusion / packing (plain JAX, free at kernel time) ----
    wqkv = jnp.concatenate([params["wq"] * scale, params["wk"], params["wv"]],
                           axis=1)                                   # [H, 3H] lane-dense
    b_packed = jnp.concatenate([params["bq"] * scale, params["bk"], params["bv"],
                                params["bo"], params["b1"], params["b2"]],
                               axis=1)                               # [1, 3H+H+F+H]
    ln = jnp.concatenate([params["ln1_g"], params["ln1_b"],
                          params["ln2_g"], params["ln2_b"]], axis=0)  # [4, H]

    # Additive block-diagonal mask over the flattened B*S row axis: suppresses
    # cross-batch attention terms (precomputed here, not in-kernel).
    row = jnp.arange(R, dtype=jnp.int32) // S
    mask = jnp.where(row[:, None] == row[None, :], 0.0, -1e30).astype(jnp.float32)  # [R, R]

    vmem = pl.BlockSpec(memory_space=pltpu.MemorySpace.VMEM)
    out2d = pl.pallas_call(
        encoder_layer_kernel,
        out_shape=jax.ShapeDtypeStruct((R, H), jnp.float32),
        in_specs=[vmem] * 8,
        out_specs=vmem,
    )(x.reshape(R, H), ln, wqkv, params["wo"], params["w1"], params["w2"],
      b_packed, mask)
    return out2d.reshape(B, S, H)


def reference_forward(x, p):
    """Pure-JAX reference for correctness checking (matches the PyTorch module, eval mode)."""
    def ln(z, g, b):
        m = jnp.mean(z, -1, keepdims=True)
        v = jnp.mean((z - m) ** 2, -1, keepdims=True)
        return (z - m) * jax.lax.rsqrt(v + LN_EPS) * g + b

    h1 = ln(x, p["ln1_g"][0], p["ln1_b"][0])
    q = h1 @ p["wq"] + p["bq"][0]
    k = h1 @ p["wk"] + p["bk"][0]
    v = h1 @ p["wv"] + p["bv"][0]
    outs = []
    for h in range(NUM_HEADS):
        sl = slice(h * HEAD_DIM, (h + 1) * HEAD_DIM)
        qh, kh, vh = q[..., sl], k[..., sl], v[..., sl]
        a = jax.nn.softmax(jnp.einsum("bsd,btd->bst", qh, kh) / math.sqrt(HEAD_DIM), axis=-1)
        outs.append(jnp.einsum("bst,btd->bsd", a, vh))
    ctx = jnp.concatenate(outs, -1)
    x1 = x + ctx @ p["wo"] + p["bo"][0]
    h2 = ln(x1, p["ln2_g"][0], p["ln2_b"][0])
    f = jax.nn.gelu(h2 @ p["w1"] + p["b1"][0], approximate=False)
    return x1 + f @ p["w2"] + p["b2"][0]


def make_params(key):
    keys = jax.random.split(key, 12)
    scale = 0.02
    p = {
        "ln1_g": jnp.ones((1, HIDDEN), jnp.float32),
        "ln1_b": jnp.zeros((1, HIDDEN), jnp.float32),
        "ln2_g": jnp.ones((1, HIDDEN), jnp.float32),
        "ln2_b": jnp.zeros((1, HIDDEN), jnp.float32),
        "wq": scale * jax.random.normal(keys[0], (HIDDEN, HIDDEN), jnp.float32),
        "bq": scale * jax.random.normal(keys[1], (1, HIDDEN), jnp.float32),
        "wk": scale * jax.random.normal(keys[2], (HIDDEN, HIDDEN), jnp.float32),
        "bk": scale * jax.random.normal(keys[3], (1, HIDDEN), jnp.float32),
        "wv": scale * jax.random.normal(keys[4], (HIDDEN, HIDDEN), jnp.float32),
        "bv": scale * jax.random.normal(keys[5], (1, HIDDEN), jnp.float32),
        "wo": scale * jax.random.normal(keys[6], (HIDDEN, HIDDEN), jnp.float32),
        "bo": scale * jax.random.normal(keys[7], (1, HIDDEN), jnp.float32),
        "w1": scale * jax.random.normal(keys[8], (HIDDEN, INTERMEDIATE), jnp.float32),
        "b1": scale * jax.random.normal(keys[9], (1, INTERMEDIATE), jnp.float32),
        "w2": scale * jax.random.normal(keys[10], (INTERMEDIATE, HIDDEN), jnp.float32),
        "b2": scale * jax.random.normal(keys[11], (1, HIDDEN), jnp.float32),
    }
    return p


if __name__ == "__main__":
    key = jax.random.PRNGKey(0)
    kx, kp = jax.random.split(key)
    x = jax.random.normal(kx, (BATCH, SEQ, HIDDEN), jnp.float32)
    params = make_params(kp)

    out = transformer_encoder_layer(x, params)
    out = jax.block_until_ready(out)

    ref = reference_forward(x, params)
    assert out.shape == (BATCH, SEQ, HIDDEN)
    # Tolerance 1e-3: the approximate EUP reciprocal in the softmax and the folded
    # attention scale introduce small (<~1e-4) deviations vs. the exact reference.
    assert jnp.allclose(out, ref, atol=1e-3, rtol=1e-3), "Pallas output mismatch vs reference"

    print("KERNEL_OK")
</pallas_src>

<mosaic_0001>
module attributes {stable_mosaic.version = 11 : i64} {
  func.func @encoder_layer_kernel(%arg0: memref<16x32xf32, #tpu.memory_space<vmem>>, %arg1: memref<4x32xf32, #tpu.memory_space<vmem>>, %arg2: memref<32x96xf32, #tpu.memory_space<vmem>>, %arg3: memref<32x32xf32, #tpu.memory_space<vmem>>, %arg4: memref<32x64xf32, #tpu.memory_space<vmem>>, %arg5: memref<64x32xf32, #tpu.memory_space<vmem>>, %arg6: memref<1x224xf32, #tpu.memory_space<vmem>>, %arg7: memref<16x16xf32, #tpu.memory_space<vmem>>, %arg8: memref<16x32xf32, #tpu.memory_space<vmem>>) attributes {dimension_semantics = [], scalar_prefetch = 0 : i64, scratch_operands = 0 : i64, tpu.core_type = #tpu.core_type<tc>} {
    %c0 = arith.constant 0 : index
    %c0_0 = arith.constant 0 : index
    %0 = vector.load %arg0[%c0, %c0_0] : memref<16x32xf32, #tpu.memory_space<vmem>>, vector<16x32xf32>
    %c0_1 = arith.constant 0 : index
    %c0_2 = arith.constant 0 : index
    %1 = vector.load %arg1[%c0_1, %c0_2] : memref<4x32xf32, #tpu.memory_space<vmem>>, vector<1x32xf32>
    %c1 = arith.constant 1 : index
    %c0_3 = arith.constant 0 : index
    %2 = vector.load %arg1[%c1, %c0_3] : memref<4x32xf32, #tpu.memory_space<vmem>>, vector<1x32xf32>
    %cst = arith.constant dense<0.000000e+00> : vector<16xf32>
    %3 = vector.multi_reduction <add>, %0, %cst [1] : vector<16x32xf32> to vector<16xf32>
    %4 = vector.shape_cast %3 : vector<16xf32> to vector<16x1xf32>
    %cst_4 = arith.constant 3.200000e+01 : f32
    %5 = vector.broadcast %cst_4 : f32 to vector<16x1xf32>
    %6 = arith.divf %4, %5 : vector<16x1xf32>
    %7 = vector.broadcast %6 : vector<16x1xf32> to vector<16x32xf32>
    %8 = arith.subf %0, %7 : vector<16x32xf32>
    %9 = arith.mulf %8, %8 : vector<16x32xf32>
    %cst_5 = arith.constant dense<0.000000e+00> : vector<16xf32>
    %10 = vector.multi_reduction <add>, %9, %cst_5 [1] : vector<16x32xf32> to vector<16xf32>
    %11 = vector.shape_cast %10 : vector<16xf32> to vector<16x1xf32>
    %cst_6 = arith.constant 3.200000e+01 : f32
    %12 = vector.broadcast %cst_6 : f32 to vector<16x1xf32>
    %13 = arith.divf %11, %12 : vector<16x1xf32>
    %cst_7 = arith.constant 9.99999974E-6 : f32
    %14 = vector.broadcast %cst_7 : f32 to vector<16x1xf32>
    %15 = arith.addf %13, %14 : vector<16x1xf32>
    %16 = math.rsqrt %15 : vector<16x1xf32>
    %17 = vector.broadcast %6 : vector<16x1xf32> to vector<16x32xf32>
    %18 = arith.subf %0, %17 : vector<16x32xf32>
    %19 = vector.broadcast %16 : vector<16x1xf32> to vector<16x32xf32>
    %20 = arith.mulf %18, %19 : vector<16x32xf32>
    %21 = vector.broadcast %1 : vector<1x32xf32> to vector<16x32xf32>
    %22 = arith.mulf %20, %21 : vector<16x32xf32>
    %23 = vector.broadcast %2 : vector<1x32xf32> to vector<16x32xf32>
    %24 = arith.addf %22, %23 : vector<16x32xf32>
    %c0_8 = arith.constant 0 : index
    %c0_9 = arith.constant 0 : index
    %25 = vector.load %arg2[%c0_8, %c0_9] : memref<32x96xf32, #tpu.memory_space<vmem>>, vector<32x96xf32>
    %cst_10 = arith.constant dense<0.000000e+00> : vector<16x96xf32>
    %26 = tpu.matmul %24, %25, %cst_10 {dimension_numbers = #tpu.dot_dimension_numbers<[1], [0], [0], [1], [0, 0, 1, 1], [], []>} : vector<16x32xf32>, vector<32x96xf32>, vector<16x96xf32> -> vector<16x96xf32>
    %c0_11 = arith.constant 0 : index
    %c0_12 = arith.constant 0 : index
    %27 = vector.load %arg6[%c0_11, %c0_12] : memref<1x224xf32, #tpu.memory_space<vmem>>, vector<1x96xf32>
    %28 = vector.broadcast %27 : vector<1x96xf32> to vector<16x96xf32>
    %29 = arith.addf %26, %28 : vector<16x96xf32>
    %c0_13 = arith.constant 0 : index
    %c0_14 = arith.constant 0 : index
    %30 = vector.load %arg7[%c0_13, %c0_14] : memref<16x16xf32, #tpu.memory_space<vmem>>, vector<16x16xf32>
    %c0_15 = arith.constant 0 : index
    %c0_16 = arith.constant 0 : index
    %31 = vector.load %arg3[%c0_15, %c0_16] : memref<32x32xf32, #tpu.memory_space<vmem>>, vector<32x32xf32>
    %32 = vector.extract_strided_slice %29 {offsets = [0, 0], sizes = [16, 8], strides = [1, 1]} : vector<16x96xf32> to vector<16x8xf32>
    %33 = vector.extract_strided_slice %29 {offsets = [0, 32], sizes = [16, 8], strides = [1, 1]} : vector<16x96xf32> to vector<16x8xf32>
    %34 = vector.extract_strided_slice %29 {offsets = [0, 64], sizes = [16, 8], strides = [1, 1]} : vector<16x96xf32> to vector<16x8xf32>
    %cst_17 = arith.constant dense<0.000000e+00> : vector<16x16xf32>
    %35 = tpu.matmul %32, %33, %cst_17 {dimension_numbers = #tpu.dot_dimension_numbers<[1], [1], [0], [0], [0, 0, 1, 0], [], []>} : vector<16x8xf32>, vector<16x8xf32>, vector<16x16xf32> -> vector<16x16xf32>
    %36 = arith.addf %35, %30 : vector<16x16xf32>
    %cst_18 = arith.constant dense<0xFF800000> : vector<16xf32>
    %37 = vector.multi_reduction <maximumf>, %36, %cst_18 [1] : vector<16x16xf32> to vector<16xf32>
    %38 = vector.shape_cast %37 : vector<16xf32> to vector<16x1xf32>
    %39 = vector.broadcast %38 : vector<16x1xf32> to vector<16x16xf32>
    %40 = arith.subf %36, %39 : vector<16x16xf32>
    %41 = math.exp %40 : vector<16x16xf32>
    %cst_19 = arith.constant dense<0.000000e+00> : vector<16xf32>
    %42 = vector.multi_reduction <add>, %41, %cst_19 [1] : vector<16x16xf32> to vector<16xf32>
    %43 = vector.shape_cast %42 : vector<16xf32> to vector<16x1xf32>
    %44 = tpu.reciprocal %43 {approx = true} : vector<16x1xf32> -> vector<16x1xf32>
    %45 = vector.broadcast %44 : vector<16x1xf32> to vector<16x16xf32>
    %46 = arith.mulf %41, %45 : vector<16x16xf32>
    %cst_20 = arith.constant dense<0.000000e+00> : vector<16x8xf32>
    %47 = tpu.matmul %46, %34, %cst_20 {dimension_numbers = #tpu.dot_dimension_numbers<[1], [0], [0], [1], [0, 0, 1, 1], [], []>} : vector<16x16xf32>, vector<16x8xf32>, vector<16x8xf32> -> vector<16x8xf32>
    %48 = vector.extract_strided_slice %31 {offsets = [0, 0], sizes = [8, 32], strides = [1, 1]} : vector<32x32xf32> to vector<8x32xf32>
    %cst_21 = arith.constant dense<0.000000e+00> : vector<16x32xf32>
    %49 = tpu.matmul %47, %48, %cst_21 {dimension_numbers = #tpu.dot_dimension_numbers<[1], [0], [0], [1], [0, 0, 1, 1], [], []>} : vector<16x8xf32>, vector<8x32xf32>, vector<16x32xf32> -> vector<16x32xf32>
    %50 = vector.extract_strided_slice %29 {offsets = [0, 8], sizes = [16, 8], strides = [1, 1]} : vector<16x96xf32> to vector<16x8xf32>
    %51 = vector.extract_strided_slice %29 {offsets = [0, 40], sizes = [16, 8], strides = [1, 1]} : vector<16x96xf32> to vector<16x8xf32>
    %52 = vector.extract_strided_slice %29 {offsets = [0, 72], sizes = [16, 8], strides = [1, 1]} : vector<16x96xf32> to vector<16x8xf32>
    %cst_22 = arith.constant dense<0.000000e+00> : vector<16x16xf32>
    %53 = tpu.matmul %50, %51, %cst_22 {dimension_numbers = #tpu.dot_dimension_numbers<[1], [1], [0], [0], [0, 0, 1, 0], [], []>} : vector<16x8xf32>, vector<16x8xf32>, vector<16x16xf32> -> vector<16x16xf32>
    %54 = arith.addf %53, %30 : vector<16x16xf32>
    %cst_23 = arith.constant dense<0xFF800000> : vector<16xf32>
    %55 = vector.multi_reduction <maximumf>, %54, %cst_23 [1] : vector<16x16xf32> to vector<16xf32>
    %56 = vector.shape_cast %55 : vector<16xf32> to vector<16x1xf32>
    %57 = vector.broadcast %56 : vector<16x1xf32> to vector<16x16xf32>
    %58 = arith.subf %54, %57 : vector<16x16xf32>
    %59 = math.exp %58 : vector<16x16xf32>
    %cst_24 = arith.constant dense<0.000000e+00> : vector<16xf32>
    %60 = vector.multi_reduction <add>, %59, %cst_24 [1] : vector<16x16xf32> to vector<16xf32>
    %61 = vector.shape_cast %60 : vector<16xf32> to vector<16x1xf32>
    %62 = tpu.reciprocal %61 {approx = true} : vector<16x1xf32> -> vector<16x1xf32>
    %63 = vector.broadcast %62 : vector<16x1xf32> to vector<16x16xf32>
    %64 = arith.mulf %59, %63 : vector<16x16xf32>
    %cst_25 = arith.constant dense<0.000000e+00> : vector<16x8xf32>
    %65 = tpu.matmul %64, %52, %cst_25 {dimension_numbers = #tpu.dot_dimension_numbers<[1], [0], [0], [1], [0, 0, 1, 1], [], []>} : vector<16x16xf32>, vector<16x8xf32>, vector<16x8xf32> -> vector<16x8xf32>
    %66 = vector.extract_strided_slice %31 {offsets = [8, 0], sizes = [8, 32], strides = [1, 1]} : vector<32x32xf32> to vector<8x32xf32>
    %cst_26 = arith.constant dense<0.000000e+00> : vector<16x32xf32>
    %67 = tpu.matmul %65, %66, %cst_26 {dimension_numbers = #tpu.dot_dimension_numbers<[1], [0], [0], [1], [0, 0, 1, 1], [], []>} : vector<16x8xf32>, vector<8x32xf32>, vector<16x32xf32> -> vector<16x32xf32>
    %68 = arith.addf %49, %67 : vector<16x32xf32>
    %69 = vector.extract_strided_slice %29 {offsets = [0, 16], sizes = [16, 8], strides = [1, 1]} : vector<16x96xf32> to vector<16x8xf32>
    %70 = vector.extract_strided_slice %29 {offsets = [0, 48], sizes = [16, 8], strides = [1, 1]} : vector<16x96xf32> to vector<16x8xf32>
    %71 = vector.extract_strided_slice %29 {offsets = [0, 80], sizes = [16, 8], strides = [1, 1]} : vector<16x96xf32> to vector<16x8xf32>
    %cst_27 = arith.constant dense<0.000000e+00> : vector<16x16xf32>
    %72 = tpu.matmul %69, %70, %cst_27 {dimension_numbers = #tpu.dot_dimension_numbers<[1], [1], [0], [0], [0, 0, 1, 0], [], []>} : vector<16x8xf32>, vector<16x8xf32>, vector<16x16xf32> -> vector<16x16xf32>
    %73 = arith.addf %72, %30 : vector<16x16xf32>
    %cst_28 = arith.constant dense<0xFF800000> : vector<16xf32>
    %74 = vector.multi_reduction <maximumf>, %73, %cst_28 [1] : vector<16x16xf32> to vector<16xf32>
    %75 = vector.shape_cast %74 : vector<16xf32> to vector<16x1xf32>
    %76 = vector.broadcast %75 : vector<16x1xf32> to vector<16x16xf32>
    %77 = arith.subf %73, %76 : vector<16x16xf32>
    %78 = math.exp %77 : vector<16x16xf32>
    %cst_29 = arith.constant dense<0.000000e+00> : vector<16xf32>
    %79 = vector.multi_reduction <add>, %78, %cst_29 [1] : vector<16x16xf32> to vector<16xf32>
    %80 = vector.shape_cast %79 : vector<16xf32> to vector<16x1xf32>
    %81 = tpu.reciprocal %80 {approx = true} : vector<16x1xf32> -> vector<16x1xf32>
    %82 = vector.broadcast %81 : vector<16x1xf32> to vector<16x16xf32>
    %83 = arith.mulf %78, %82 : vector<16x16xf32>
    %cst_30 = arith.constant dense<0.000000e+00> : vector<16x8xf32>
    %84 = tpu.matmul %83, %71, %cst_30 {dimension_numbers = #tpu.dot_dimension_numbers<[1], [0], [0], [1], [0, 0, 1, 1], [], []>} : vector<16x16xf32>, vector<16x8xf32>, vector<16x8xf32> -> vector<16x8xf32>
    %85 = vector.extract_strided_slice %31 {offsets = [16, 0], sizes = [8, 32], strides = [1, 1]} : vector<32x32xf32> to vector<8x32xf32>
    %cst_31 = arith.constant dense<0.000000e+00> : vector<16x32xf32>
    %86 = tpu.matmul %84, %85, %cst_31 {dimension_numbers = #tpu.dot_dimension_numbers<[1], [0], [0], [1], [0, 0, 1, 1], [], []>} : vector<16x8xf32>, vector<8x32xf32>, vector<16x32xf32> -> vector<16x32xf32>
    %87 = arith.addf %68, %86 : vector<16x32xf32>
    %88 = vector.extract_strided_slice %29 {offsets = [0, 24], sizes = [16, 8], strides = [1, 1]} : vector<16x96xf32> to vector<16x8xf32>
    %89 = vector.extract_strided_slice %29 {offsets = [0, 56], sizes = [16, 8], strides = [1, 1]} : vector<16x96xf32> to vector<16x8xf32>
    %90 = vector.extract_strided_slice %29 {offsets = [0, 88], sizes = [16, 8], strides = [1, 1]} : vector<16x96xf32> to vector<16x8xf32>
    %cst_32 = arith.constant dense<0.000000e+00> : vector<16x16xf32>
    %91 = tpu.matmul %88, %89, %cst_32 {dimension_numbers = #tpu.dot_dimension_numbers<[1], [1], [0], [0], [0, 0, 1, 0], [], []>} : vector<16x8xf32>, vector<16x8xf32>, vector<16x16xf32> -> vector<16x16xf32>
    %92 = arith.addf %91, %30 : vector<16x16xf32>
    %cst_33 = arith.constant dense<0xFF800000> : vector<16xf32>
    %93 = vector.multi_reduction <maximumf>, %92, %cst_33 [1] : vector<16x16xf32> to vector<16xf32>
    %94 = vector.shape_cast %93 : vector<16xf32> to vector<16x1xf32>
    %95 = vector.broadcast %94 : vector<16x1xf32> to vector<16x16xf32>
    %96 = arith.subf %92, %95 : vector<16x16xf32>
    %97 = math.exp %96 : vector<16x16xf32>
    %cst_34 = arith.constant dense<0.000000e+00> : vector<16xf32>
    %98 = vector.multi_reduction <add>, %97, %cst_34 [1] : vector<16x16xf32> to vector<16xf32>
    %99 = vector.shape_cast %98 : vector<16xf32> to vector<16x1xf32>
    %100 = tpu.reciprocal %99 {approx = true} : vector<16x1xf32> -> vector<16x1xf32>
    %101 = vector.broadcast %100 : vector<16x1xf32> to vector<16x16xf32>
    %102 = arith.mulf %97, %101 : vector<16x16xf32>
    %cst_35 = arith.constant dense<0.000000e+00> : vector<16x8xf32>
    %103 = tpu.matmul %102, %90, %cst_35 {dimension_numbers = #tpu.dot_dimension_numbers<[1], [0], [0], [1], [0, 0, 1, 1], [], []>} : vector<16x16xf32>, vector<16x8xf32>, vector<16x8xf32> -> vector<16x8xf32>
    %104 = vector.extract_strided_slice %31 {offsets = [24, 0], sizes = [8, 32], strides = [1, 1]} : vector<32x32xf32> to vector<8x32xf32>
    %cst_36 = arith.constant dense<0.000000e+00> : vector<16x32xf32>
    %105 = tpu.matmul %103, %104, %cst_36 {dimension_numbers = #tpu.dot_dimension_numbers<[1], [0], [0], [1], [0, 0, 1, 1], [], []>} : vector<16x8xf32>, vector<8x32xf32>, vector<16x32xf32> -> vector<16x32xf32>
    %106 = arith.addf %87, %105 : vector<16x32xf32>
    %107 = arith.addf %0, %106 : vector<16x32xf32>
    %c0_37 = arith.constant 0 : index
    %c96 = arith.constant 96 : index
    %108 = vector.load %arg6[%c0_37, %c96] : memref<1x224xf32, #tpu.memory_space<vmem>>, vector<1x32xf32>
    %109 = vector.broadcast %108 : vector<1x32xf32> to vector<16x32xf32>
    %110 = arith.addf %107, %109 : vector<16x32xf32>
    %c2 = arith.constant 2 : index
    %c0_38 = arith.constant 0 : index
    %111 = vector.load %arg1[%c2, %c0_38] : memref<4x32xf32, #tpu.memory_space<vmem>>, vector<1x32xf32>
    %c3 = arith.constant 3 : index
    %c0_39 = arith.constant 0 : index
    %112 = vector.load %arg1[%c3, %c0_39] : memref<4x32xf32, #tpu.memory_space<vmem>>, vector<1x32xf32>
    %cst_40 = arith.constant dense<0.000000e+00> : vector<16xf32>
    %113 = vector.multi_reduction <add>, %110, %cst_40 [1] : vector<16x32xf32> to vector<16xf32>
    %114 = vector.shape_cast %113 : vector<16xf32> to vector<16x1xf32>
    %cst_41 = arith.constant 3.200000e+01 : f32
    %115 = vector.broadcast %cst_41 : f32 to vector<16x1xf32>
    %116 = arith.divf %114, %115 : vector<16x1xf32>
    %117 = vector.broadcast %116 : vector<16x1xf32> to vector<16x32xf32>
    %118 = arith.subf %110, %117 : vector<16x32xf32>
    %119 = arith.mulf %118, %118 : vector<16x32xf32>
    %cst_42 = arith.constant dense<0.000000e+00> : vector<16xf32>
    %120 = vector.multi_reduction <add>, %119, %cst_42 [1] : vector<16x32xf32> to vector<16xf32>
    %121 = vector.shape_cast %120 : vector<16xf32> to vector<16x1xf32>
    %cst_43 = arith.constant 3.200000e+01 : f32
    %122 = vector.broadcast %cst_43 : f32 to vector<16x1xf32>
    %123 = arith.divf %121, %122 : vector<16x1xf32>
    %cst_44 = arith.constant 9.99999974E-6 : f32
    %124 = vector.broadcast %cst_44 : f32 to vector<16x1xf32>
    %125 = arith.addf %123, %124 : vector<16x1xf32>
    %126 = math.rsqrt %125 : vector<16x1xf32>
    %127 = vector.broadcast %116 : vector<16x1xf32> to vector<16x32xf32>
    %128 = arith.subf %110, %127 : vector<16x32xf32>
    %129 = vector.broadcast %126 : vector<16x1xf32> to vector<16x32xf32>
    %130 = arith.mulf %128, %129 : vector<16x32xf32>
    %131 = vector.broadcast %111 : vector<1x32xf32> to vector<16x32xf32>
    %132 = arith.mulf %130, %131 : vector<16x32xf32>
    %133 = vector.broadcast %112 : vector<1x32xf32> to vector<16x32xf32>
    %134 = arith.addf %132, %133 : vector<16x32xf32>
    %c0_45 = arith.constant 0 : index
    %c0_46 = arith.constant 0 : index
    %135 = vector.load %arg4[%c0_45, %c0_46] : memref<32x64xf32, #tpu.memory_space<vmem>>, vector<32x64xf32>
    %cst_47 = arith.constant dense<0.000000e+00> : vector<16x64xf32>
    %136 = tpu.matmul %134, %135, %cst_47 {dimension_numbers = #tpu.dot_dimension_numbers<[1], [0], [0], [1], [0, 0, 1, 1], [], []>} : vector<16x32xf32>, vector<32x64xf32>, vector<16x64xf32> -> vector<16x64xf32>
    %c0_48 = arith.constant 0 : index
    %c128 = arith.constant 128 : index
    %137 = vector.load %arg6[%c0_48, %c128] : memref<1x224xf32, #tpu.memory_space<vmem>>, vector<1x64xf32>
    %138 = vector.broadcast %137 : vector<1x64xf32> to vector<16x64xf32>
    %139 = arith.addf %136, %138 : vector<16x64xf32>
    %cst_49 = arith.constant 5.000000e-01 : f32
    %140 = vector.broadcast %cst_49 : f32 to vector<16x64xf32>
    %141 = arith.mulf %140, %139 : vector<16x64xf32>
    %cst_50 = arith.constant 0.707106769 : f32
    %142 = vector.broadcast %cst_50 : f32 to vector<16x64xf32>
    %143 = arith.mulf %139, %142 : vector<16x64xf32>
    %144 = math.erf %143 : vector<16x64xf32>
    %cst_51 = arith.constant 1.000000e+00 : f32
    %145 = vector.broadcast %cst_51 : f32 to vector<16x64xf32>
    %146 = arith.addf %145, %144 : vector<16x64xf32>
    %147 = arith.mulf %141, %146 : vector<16x64xf32>
    %c0_52 = arith.constant 0 : index
    %c0_53 = arith.constant 0 : index
    %148 = vector.load %arg5[%c0_52, %c0_53] : memref<64x32xf32, #tpu.memory_space<vmem>>, vector<64x32xf32>
    %cst_54 = arith.constant dense<0.000000e+00> : vector<16x32xf32>
    %149 = tpu.matmul %147, %148, %cst_54 {dimension_numbers = #tpu.dot_dimension_numbers<[1], [0], [0], [1], [0, 0, 1, 1], [], []>} : vector<16x64xf32>, vector<64x32xf32>, vector<16x32xf32> -> vector<16x32xf32>
    %c0_55 = arith.constant 0 : index
    %c192 = arith.constant 192 : index
    %150 = vector.load %arg6[%c0_55, %c192] : memref<1x224xf32, #tpu.memory_space<vmem>>, vector<1x32xf32>
    %151 = vector.broadcast %150 : vector<1x32xf32> to vector<16x32xf32>
    %152 = arith.addf %149, %151 : vector<16x32xf32>
    %153 = arith.addf %110, %152 : vector<16x32xf32>
    %c0_56 = arith.constant 0 : index
    %c0_57 = arith.constant 0 : index
    %154 = vector.load %arg8[%c0_56, %c0_57] : memref<16x32xf32, #tpu.memory_space<vmem>>, vector<16x32xf32>
    tpu.vector_store %arg8[%c0_56, %c0_57], %153 {strides = array<i32>} : memref<16x32xf32, #tpu.memory_space<vmem>>, vector<16x32xf32>,
    return
  }
}

</mosaic_0001>

<llo_original>
// kernel: tpu_custom_call.1
$region0: #{tpu_custom_call.1}
  #allocation0 [shape = 'u32[]', space=smem, size = 0x4, offset = 0x4, fixed_abs, tag = 'smem constant byte address 0x4 - core index']
  #allocation1 [shape = 'u32[144,128]{1,0:T(1,128)}', space=vmem, size = 0x12000, scoped, tag = 'internal scratch']
  %s0 = inlined_call_operand.hbm [shape: f32[16,32], index: 0, kind: input, shape index: {}]
  %s1 = inlined_call_operand.hbm [shape: f32[4,32], index: 1, kind: input, shape index: {}]
  %s2 = inlined_call_operand.vmem [shape: f32[32,96], index: 2, kind: input, shape index: {}]
  %s3 = inlined_call_operand.vmem [shape: f32[32,32], index: 3, kind: input, shape index: {}]
  %s4 = inlined_call_operand.vmem [shape: f32[32,64], index: 4, kind: input, shape index: {}]
  %s5 = inlined_call_operand.vmem [shape: f32[64,32], index: 5, kind: input, shape index: {}]
  %s6 = inlined_call_operand.vmem [shape: f32[1,224], index: 6, kind: input, shape index: {}]
  %s7 = inlined_call_operand.vmem [shape: f32[16,16], index: 7, kind: input, shape index: {}]
  %s8 = inlined_call_operand.hbm [shape: f32[16,32], index: 8, kind: output, shape index: {}]
  %s9 = sld [smem:[#allocation0]]
  $region50: #{tpu_custom_call.1} parent=0
    _
  %s11 = ssub.s32 1, %s9
  %s12 = scalar_select 0, %s11, %s9
  $region1: #{tpu_custom_call.1} parent=0
    #allocation2 [shape = 'u8[8192]{0}', space=vmem, size = 0x2000, scoped, tag = 'input window, operand 0, single buffered']
    #allocation3 [shape = 's32[1]{0}', space=sflag, size = 0x4, scoped, tag = 'scoped memory for tpu_custom_call.1']
    #allocation4 [shape = 's32[1]{0}', space=sflag, size = 0x4, scoped, tag = 'scoped memory for tpu_custom_call.1']
    #allocation5 [shape = 'u8[2048]{0}', space=vmem, size = 0x800, scoped, tag = 'input window, operand 1, single buffered']
    #allocation6 [shape = 's32[1]{0}', space=sflag, size = 0x4, scoped, tag = 'scoped memory for tpu_custom_call.1']
    #allocation7 [shape = 'u8[8192]{0}', space=vmem, size = 0x2000, scoped, tag = 'output window, operand 0, single buffered']
    %13 = vsyncpa [#allocation3], 0
    %14 = vsyncpa [#allocation6], 0
    %15 = vsyncpa [#allocation4], 0
    // Predicated region
    $region2: #{tpu_custom_call.1} parent=1 // pred_check
      _
    $region3: #{tpu_custom_call.1} parent=1 // pred_check_branch
      %17 = sbr.rel (0) target = $region5
    $region4: #{tpu_custom_call.1} parent=1 // pred_region
      %s19 = ssub.s32 256, 256
      %20 = vsyncadd [#allocation3], %s19
      %s21 = sshll.u32 [#allocation2], 4
      %s22 = int_to_ptr.vmem [resolvable:$true] %s21
      %27 = dma.hbm_to_vmem [thread:$0]  %s0, 256, %s22, [#allocation3], 128, 128, 8
    $region5: #{tpu_custom_call.1} parent=1 // pred_fallthru
      _
    // Predicated region
    $region6: #{tpu_custom_call.1} parent=1 // pred_check
      _
    $region7: #{tpu_custom_call.1} parent=1 // pred_check_branch
      %29 = sbr.rel (0) target = $region9
    $region8: #{tpu_custom_call.1} parent=1 // pred_region
      %s31 = ssub.s32 64, 64
      %32 = vsyncadd [#allocation6], %s31
      %s34 = sshll.u32 [#allocation5], 4
      %s35 = int_to_ptr.vmem [resolvable:$true] %s34
      %37 = dma.hbm_to_vmem [thread:$0]  %s1, 64, %s35, [#allocation6]
    $region9: #{tpu_custom_call.1} parent=1 // pred_fallthru
      _
    // Predicated region
    $region10: #{tpu_custom_call.1} parent=1 // pred_check
      _
    $region11: #{tpu_custom_call.1} parent=1 // pred_check_branch
      %39 = sbr.rel (0) target = $region13
    $region12: #{tpu_custom_call.1} parent=1 // pred_region
      _
    $region13: #{tpu_custom_call.1} parent=1 // pred_fallthru
      _
    // Predicated region
    $region14: #{tpu_custom_call.1} parent=1 // pred_check
      _
    $region15: #{tpu_custom_call.1} parent=1 // pred_check_branch
      %41 = sbr.rel (0) target = $region17
    $region16: #{tpu_custom_call.1} parent=1 // pred_region
      _
    $region17: #{tpu_custom_call.1} parent=1 // pred_fallthru
      _
    // Predicated region
    $region18: #{tpu_custom_call.1} parent=1 // pred_check
      _
    $region19: #{tpu_custom_call.1} parent=1 // pred_check_branch
      %43 = sbr.rel (0) target = $region21
    $region20: #{tpu_custom_call.1} parent=1 // pred_region
      _
    $region21: #{tpu_custom_call.1} parent=1 // pred_fallthru
      _
    // Predicated region
    $region22: #{tpu_custom_call.1} parent=1 // pred_check
      _
    $region23: #{tpu_custom_call.1} parent=1 // pred_check_branch
      %45 = sbr.rel (0) target = $region25
    $region24: #{tpu_custom_call.1} parent=1 // pred_region
      _
    $region25: #{tpu_custom_call.1} parent=1 // pred_fallthru
      _
    // Predicated region
    $region26: #{tpu_custom_call.1} parent=1 // pred_check
      _
    $region27: #{tpu_custom_call.1} parent=1 // pred_check_branch
      %47 = sbr.rel (0) target = $region29
    $region28: #{tpu_custom_call.1} parent=1 // pred_region
      _
    $region29: #{tpu_custom_call.1} parent=1 // pred_fallthru
      _
    // Predicated region
    $region30: #{tpu_custom_call.1} parent=1 // pred_check
      _
    $region31: #{tpu_custom_call.1} parent=1 // pred_check_branch
      %49 = sbr.rel (0) target = $region33
    $region32: #{tpu_custom_call.1} parent=1 // pred_region
      _
    $region33: #{tpu_custom_call.1} parent=1 // pred_fallthru
      _
    // Predicated region
    $region34: #{tpu_custom_call.1} parent=1 // pred_check
      _
    $region35: #{tpu_custom_call.1} parent=1 // pred_check_branch
      %51 = sbr.rel (0) target = $region37
    $region36: #{tpu_custom_call.1} parent=1 // pred_region
      %52 = dma.done [#allocation3], 256
    $region37: #{tpu_custom_call.1} parent=1 // pred_fallthru
      _
    // Predicated region
    $region38: #{tpu_custom_call.1} parent=1 // pred_check
      _
    $region39: #{tpu_custom_call.1} parent=1 // pred_check_branch
      %54 = sbr.rel (0) target = $region41
    $region40: #{tpu_custom_call.1} parent=1 // pred_region
      %55 = dma.done [#allocation6], 64
    $region41: #{tpu_custom_call.1} parent=1 // pred_fallthru
      _
    %v56 = vld [vmem:[#allocation2] sm:$0xff]
    %v57 = vld [vmem:[#allocation2 + $0x8] sm:$0xff]
    %v58 = vld [vmem:[#allocation5] sm:$0x1]
    %v59 = vld [vmem:[#allocation5 + $0x1] sm:$0x1]
    %vm60 = vcmask 261120
    %v61 = vsel %vm60, %v56, 0.0
    %62 = vadd.xlane.f32.xlu0 %v61
    %v63 = vpop.xlane.xlu0 %62
    %v64 = vsel %vm60, %v57, 0.0
    %65 = vadd.xlane.f32.xlu0 %v64
    %v66 = vpop.xlane.xlu0 %65
    %v67 = vrcp.pop 32.0
    %v68 = vmul.f32 %v63, %v67
    %v69 = vmul.f32 %v66, %v67
    %v70 = vsub.f32 %v56, %v68
    %v71 = vsub.f32 %v57, %v69
    %v72 = vmul.f32 %v70, %v70
    %v73 = vmul.f32 %v71, %v71
    %v74 = vsel %vm60, %v72, 0.0
    %75 = vadd.xlane.f32.xlu0 %v74
    %v76 = vpop.xlane.xlu0 %75
    %v77 = vsel %vm60, %v73, 0.0
    %78 = vadd.xlane.f32.xlu0 %v77
    %v79 = vpop.xlane.xlu0 %78
    %v80 = vmul.f32 %v76, %v67
    %v81 = vmul.f32 %v79, %v67
    %v82 = vadd.f32 %v80, 1e-05
    %v83 = vadd.f32 %v81, 1e-05
    %v84 = vrsqrt.pop %v82
    %v85 = vrsqrt.pop %v83
    %v86 = vmul.f32 %v70, %v84
    %v87 = vmul.f32 %v71, %v85
    %v88 = vlaneseq
    %v89 = vshrl.u32 %v88, 7
    %v90 = vsub.s32 0, %v89
    %v91 = vrot.slane %v58, %v90
    %v92 = vmul.f32 %v86, %v91
    %v93 = vmul.f32 %v87, %v91
    %v94 = vlaneseq
    %v95 = vshrl.u32 %v94, 7
    %v96 = vsub.s32 0, %v95
    %v97 = vrot.slane %v59, %v96
    %v98 = vadd.f32 %v92, %v97
    %v99 = vadd.f32 %v93, %v97
    %v100 = vld [vmem:[%s2] sm:$0xff]
    %v101 = vld [vmem:[%s2 + $0x8] sm:$0xff]
    %v102 = vld [vmem:[%s2 + $0x10] sm:$0xff]
    %v103 = vld [vmem:[%s2 + $0x18] sm:$0xff]
    %v104 = vld [vmem:[%s6] sm:$0x1]
    %v106 = vlaneseq
    %v107 = vshrl.u32 %v106, 7
    %v108 = vsub.s32 0, %v107
    %v109 = vrot.slane %v104, %v108
    %v112 = vsel %vm60, %v98, 0
    %v115 = vsel %vm60, %v99, 0
    %117 = vmatprep.subr.mxu0 0.0
    %118 = vmatpush1.msra.mxu0 %v100
    %119 = vmatprep.subr.mxu0 0.0
    %120 = vmatpush1.msra.mxu0 %v101
    %121 = vmatprep.subr.mxu0 0.0
    %122 = vmatpush1.msra.mxu0 %v102
    %123 = vmatprep.subr.mxu0 0.0
    %124 = vmatpush1.msra.mxu0 %v103
    %125 = vmatprep.subr.mxu0 0.0
    %126 = vmatpush1.msra.mxu0 0.0
    %127 = vmatprep.subr.mxu0 0.0
    %128 = vmatpush1.msra.mxu0 0.0
    %129 = vmatprep.subr.mxu0 0.0
    %130 = vmatpush1.msra.mxu0 0.0
    %131 = vmatprep.subr.mxu0 0.0
    %132 = vmatpush1.msra.mxu0 0.0
    %133 = vmatprep.subr.mxu0 0.0
    %134 = vmatpush1.msra.mxu0 0.0
    %135 = vmatprep.subr.mxu0 0.0
    %136 = vmatpush1.msra.mxu0 0.0
    %137 = vmatprep.subr.mxu0 0.0
    %138 = vmatpush1.msra.mxu0 0.0
    %139 = vmatprep.subr.mxu0 0.0
    %140 = vmatpush1.msra.mxu0 0.0
    %141 = vmatprep.subr.mxu0 0.0
    %142 = vmatpush1.msra.mxu0 0.0
    %143 = vmatprep.subr.mxu0 0.0
    %144 = vmatpush1.msra.mxu0 0.0
    %145 = vmatprep.subr.mxu0 0.0
    %146 = vmatpush1.msra.mxu0 0.0
    %147 = vmatprep.subr.mxu0 0.0
    %148 = vmatpush1.msra.mxu0 0.0
    %149 = vmatprep.subr.mxu0 0.0
    %150 = vmatpush1.msra.mxu0 0.0
    %151 = vmatprep.subr.mxu0 0.0
    %152 = vmatpush1.msra.mxu0 0.0
    %153 = vmatprep.subr.mxu0 0.0
    %154 = vmatpush1.msra.mxu0 0.0
    %155 = vmatprep.subr.mxu0 0.0
    %156 = vmatpush1.msra.mxu0 0.0
    %157 = vmatprep.subr.mxu0 0.0
    %158 = vmatpush1.msra.mxu0 0.0
    %159 = vmatprep.subr.mxu0 0.0
    %160 = vmatpush1.msra.mxu0 0.0
    %161 = vmatprep.subr.mxu0 0.0
    %162 = vmatpush1.msra.mxu0 0.0
    %163 = vmatprep.subr.mxu0 0.0
    %164 = vmatpush1.msra.mxu0 0.0
    %165 = vmatprep.subr.mxu0 0.0
    %166 = vmatpush1.msra.mxu0 0.0
    %167 = vmatprep.subr.mxu0 0.0
    %168 = vmatpush1.msra.mxu0 0.0
    %169 = vmatprep.subr.mxu0 0.0
    %170 = vmatpush1.msra.mxu0 0.0
    %171 = vmatprep.subr.mxu0 0.0
    %172 = vmatpush1.msra.mxu0 0.0
    %173 = vmatprep.subr.mxu0 0.0
    %174 = vmatpush1.msra.mxu0 0.0
    %175 = vmatprep.subr.mxu0 0.0
    %176 = vmatpush1.msra.mxu0 0.0
    %177 = vmatprep.subr.mxu0 0.0
    %178 = vmatpush1.msra.mxu0 0.0
    %179 = vmatprep.subr.mxu0 0.0
    %180 = vmatpush1.msra.mxu0 0.0
    %181 = vmatprep.mubr.f32.mxu0 0.0
    %182 = vmatmul.mubr.f32.gmra.mrb[0].mxu0 %v112
    %v183 = vpop.f32.mrb[0].mxu0
    %v184 = vadd.f32 %v109, %v183
    %v185 = vpop.f32.mrb[0].mxu0
    %186 = vmatprep.mubr.f32.mxu0 0.0
    %187 = vmatmul.mubr.f32.gmra.mrb[0].mxu0 %v115
    %v188 = vpop.f32.mrb[0].mxu0
    %v189 = vadd.f32 %v109, %v188
    %v190 = vpop.f32.mrb[0].mxu0
    %191 = vdwg.mxu0
    %v192 = vld [vmem:[%s7] sm:$0xff]
    %v193 = vld [vmem:[%s7 + $0x8] sm:$0xff]
    %v194 = vld [vmem:[%s3] sm:$0xff]
    %v195 = vld [vmem:[%s3 + $0x8] sm:$0xff]
    %v196 = vld [vmem:[%s3 + $0x10] sm:$0xff]
    %v197 = vld [vmem:[%s3 + $0x18] sm:$0xff]
    %200 = vrot.lane.b32.xlu0 %v184, 96
    %v201 = vpop.permute.xlu0 %200
    %202 = vrot.lane.b32.xlu0 %v189, 96
    %v203 = vpop.permute.xlu0 %202
    %vm204 = vcmask 64512
    %v205 = vsel %vm204, %v184, 0
    %v207 = vsel %vm204, %v189, 0
    %v209 = vsel %vm204, %v201, 0
    %v211 = vsel %vm204, %v203, 0
    %213 = vmatprep.subr.mxu0 0.0
    %214 = vmatpush1.xpose.msra.mxu0 %v209
    %215 = vmatprep.subr.mxu0 0.0
    %216 = vmatpush1.xpose.msra.mxu0 %v211
    %217 = vmatprep.subr.mxu0 0.0
    %218 = vmatpush1.xpose.msra.mxu0 0.0
    %219 = vmatprep.subr.mxu0 0.0
    %220 = vmatpush1.xpose.msra.mxu0 0.0
    %221 = vmatprep.subr.mxu0 0.0
    %222 = vmatpush1.xpose.msra.mxu0 0.0
    %223 = vmatprep.subr.mxu0 0.0
    %224 = vmatpush1.xpose.msra.mxu0 0.0
    %225 = vmatprep.subr.mxu0 0.0
    %226 = vmatpush1.xpose.msra.mxu0 0.0
    %227 = vmatprep.subr.mxu0 0.0
    %228 = vmatpush1.xpose.msra.mxu0 0.0
    %229 = vmatprep.subr.mxu0 0.0
    %230 = vmatpush1.xpose.msra.mxu0 0.0
    %231 = vmatprep.subr.mxu0 0.0
    %232 = vmatpush1.xpose.msra.mxu0 0.0
    %233 = vmatprep.subr.mxu0 0.0
    %234 = vmatpush1.xpose.msra.mxu0 0.0
    %235 = vmatprep.subr.mxu0 0.0
    %236 = vmatpush1.xpose.msra.mxu0 0.0
    %237 = vmatprep.subr.mxu0 0.0
    %238 = vmatpush1.xpose.msra.mxu0 0.0
    %239 = vmatprep.subr.mxu0 0.0
    %240 = vmatpush1.xpose.msra.mxu0 0.0
    %241 = vmatprep.subr.mxu0 0.0
    %242 = vmatpush1.xpose.msra.mxu0 0.0
    %243 = vmatprep.subr.mxu0 0.0
    %244 = vmatpush1.xpose.msra.mxu0 0.0
    %245 = vmatprep.subr.mxu0 0.0
    %246 = vmatpush1.xpose.msra.mxu0 0.0
    %247 = vmatprep.subr.mxu0 0.0
    %248 = vmatpush1.xpose.msra.mxu0 0.0
    %249 = vmatprep.subr.mxu0 0.0
    %250 = vmatpush1.xpose.msra.mxu0 0.0
    %251 = vmatprep.subr.mxu0 0.0
    %252 = vmatpush1.xpose.msra.mxu0 0.0
    %253 = vmatprep.subr.mxu0 0.0
    %254 = vmatpush1.xpose.msra.mxu0 0.0
    %255 = vmatprep.subr.mxu0 0.0
    %256 = vmatpush1.xpose.msra.mxu0 0.0
    %257 = vmatprep.subr.mxu0 0.0
    %258 = vmatpush1.xpose.msra.mxu0 0.0
    %259 = vmatprep.subr.mxu0 0.0
    %260 = vmatpush1.xpose.msra.mxu0 0.0
    %261 = vmatprep.subr.mxu0 0.0
    %262 = vmatpush1.xpose.msra.mxu0 0.0
    %263 = vmatprep.subr.mxu0 0.0
    %264 = vmatpush1.xpose.msra.mxu0 0.0
    %265 = vmatprep.subr.mxu0 0.0
    %266 = vmatpush1.xpose.msra.mxu0 0.0
    %267 = vmatprep.subr.mxu0 0.0
    %268 = vmatpush1.xpose.msra.mxu0 0.0
    %269 = vmatprep.subr.mxu0 0.0
    %270 = vmatpush1.xpose.msra.mxu0 0.0
    %271 = vmatprep.subr.mxu0 0.0
    %272 = vmatpush1.xpose.msra.mxu0 0.0
    %273 = vmatprep.subr.mxu0 0.0
    %274 = vmatpush1.xpose.msra.mxu0 0.0
    %275 = vmatprep.subr.mxu0 0.0
    %276 = vmatpush1.xpose.msra.mxu0 0.0
    %277 = vmatprep.mubr.f32.mxu0 0.0
    %278 = vmatmul.mubr.f32.gmra.mrb[0].mxu0 %v205
    %v279 = vpop.f32.mrb[0].mxu0
    %v280 = vadd.f32 %v192, %v279
    %v281 = vpop.f32.mrb[0].mxu0
    %282 = vmatprep.mubr.f32.mxu0 0.0
    %283 = vmatmul.mubr.f32.gmra.mrb[0].mxu0 %v207
    %v284 = vpop.f32.mrb[0].mxu0
    %v285 = vadd.f32 %v193, %v284
    %v286 = vpop.f32.mrb[0].mxu0
    %287 = vdwg.mxu0
    %vm288 = vcmask 130048
    %v289 = vsel %vm288, %v280, -inf
    %290 = vmax.xlane.f32.xlu0 %v289
    %v291 = vpop.xlane.xlu0 %290
    %v292 = vsel %vm288, %v285, -inf
    %293 = vmax.xlane.f32.xlu0 %v292
    %v294 = vpop.xlane.xlu0 %293
    %v295 = vsub.f32 %v280, %v291
    %v296 = vsub.f32 %v285, %v294
    %v297 = vmul.f32 %v295, 1.442695
    %v298 = vpow.pop %v297
    %v299 = vmul.f32 %v296, 1.442695
    %v300 = vpow.pop %v299
    %v301 = vsel %vm288, %v298, 0.0
    %302 = vadd.xlane.f32.xlu0 %v301
    %v303 = vpop.xlane.xlu0 %302
    %v304 = vsel %vm288, %v300, 0.0
    %305 = vadd.xlane.f32.xlu0 %v304
    %v306 = vpop.xlane.xlu0 %305
    %v307 = vrcp.pop %v303
    %v308 = vrcp.pop %v306
    %v309 = vmul.f32 %v298, %v307
    %v310 = vmul.f32 %v300, %v308
    %311 = vrot.lane.b32.xlu0 %v184, 64
    %v312 = vpop.permute.xlu0 %311
    %313 = vrot.lane.b32.xlu0 %v189, 64
    %v314 = vpop.permute.xlu0 %313
    %v318 = vsel %vm288, %v309, 0
    %v321 = vsel %vm288, %v310, 0
    %323 = vmatprep.subr.mxu0 0.0
    %324 = vmatpush1.msra.mxu0 %v312
    %325 = vmatprep.subr.mxu0 0.0
    %326 = vmatpush1.msra.mxu0 %v314
    %327 = vmatprep.subr.mxu0 0.0
    %328 = vmatpush1.msra.mxu0 0.0
    %329 = vmatprep.subr.mxu0 0.0
    %330 = vmatpush1.msra.mxu0 0.0
    %331 = vmatprep.subr.mxu0 0.0
    %332 = vmatpush1.msra.mxu0 0.0
    %333 = vmatprep.subr.mxu0 0.0
    %334 = vmatpush1.msra.mxu0 0.0
    %335 = vmatprep.subr.mxu0 0.0
    %336 = vmatpush1.msra.mxu0 0.0
    %337 = vmatprep.subr.mxu0 0.0
    %338 = vmatpush1.msra.mxu0 0.0
    %339 = vmatprep.subr.mxu0 0.0
    %340 = vmatpush1.msra.mxu0 0.0
    %341 = vmatprep.subr.mxu0 0.0
    %342 = vmatpush1.msra.mxu0 0.0
    %343 = vmatprep.subr.mxu0 0.0
    %344 = vmatpush1.msra.mxu0 0.0
    %345 = vmatprep.subr.mxu0 0.0
    %346 = vmatpush1.msra.mxu0 0.0
    %347 = vmatprep.subr.mxu0 0.0
    %348 = vmatpush1.msra.mxu0 0.0
    %349 = vmatprep.subr.mxu0 0.0
    %350 = vmatpush1.msra.mxu0 0.0
    %351 = vmatprep.subr.mxu0 0.0
    %352 = vmatpush1.msra.mxu0 0.0
    %353 = vmatprep.subr.mxu0 0.0
    %354 = vmatpush1.msra.mxu0 0.0
    %355 = vmatprep.subr.mxu0 0.0
    %356 = vmatpush1.msra.mxu0 0.0
    %357 = vmatprep.subr.mxu0 0.0
    %358 = vmatpush1.msra.mxu0 0.0
    %359 = vmatprep.subr.mxu0 0.0
    %360 = vmatpush1.msra.mxu0 0.0
    %361 = vmatprep.subr.mxu0 0.0
    %362 = vmatpush1.msra.mxu0 0.0
    %363 = vmatprep.subr.mxu0 0.0
    %364 = vmatpush1.msra.mxu0 0.0
    %365 = vmatprep.subr.mxu0 0.0
    %366 = vmatpush1.msra.mxu0 0.0
    %367 = vmatprep.subr.mxu0 0.0
    %368 = vmatpush1.msra.mxu0 0.0
    %369 = vmatprep.subr.mxu0 0.0
    %370 = vmatpush1.msra.mxu0 0.0
    %371 = vmatprep.subr.mxu0 0.0
    %372 = vmatpush1.msra.mxu0 0.0
    %373 = vmatprep.subr.mxu0 0.0
    %374 = vmatpush1.msra.mxu0 0.0
    %375 = vmatprep.subr.mxu0 0.0
    %376 = vmatpush1.msra.mxu0 0.0
    %377 = vmatprep.subr.mxu0 0.0
    %378 = vmatpush1.msra.mxu0 0.0
    %379 = vmatprep.subr.mxu0 0.0
    %380 = vmatpush1.msra.mxu0 0.0
    %381 = vmatprep.subr.mxu0 0.0
    %382 = vmatpush1.msra.mxu0 0.0
    %383 = vmatprep.subr.mxu0 0.0
    %384 = vmatpush1.msra.mxu0 0.0
    %385 = vmatprep.subr.mxu0 0.0
    %386 = vmatpush1.msra.mxu0 0.0
    %387 = vmatprep.mubr.f32.mxu0 0.0
    %388 = vmatmul.mubr.f32.gmra.mrb[0].mxu0 %v318
    %v389 = vpop.f32.mrb[0].mxu0
    %v390 = vadd.f32 0.0, %v389
    %v391 = vpop.f32.mrb[0].mxu0
    %392 = vmatprep.mubr.f32.mxu0 0.0
    %393 = vmatmul.mubr.f32.gmra.mrb[0].mxu0 %v321
    %v394 = vpop.f32.mrb[0].mxu0
    %v395 = vadd.f32 0.0, %v394
    %v396 = vpop.f32.mrb[0].mxu0
    %397 = vdwg.mxu0
    %398 = vrot.lane.b32.xlu0 %v184, 120
    %v399 = vpop.permute.xlu0 %398
    %400 = vrot.lane.b32.xlu0 %v189, 120
    %v401 = vpop.permute.xlu0 %400
    %402 = vrot.lane.b32.xlu0 %v184, 88
    %v403 = vpop.permute.xlu0 %402
    %404 = vrot.lane.b32.xlu0 %v189, 88
    %v405 = vpop.permute.xlu0 %404
    %v406 = vsel %vm204, %v399, 0
    %v408 = vsel %vm204, %v401, 0
    %v410 = vsel %vm204, %v403, 0
    %v412 = vsel %vm204, %v405, 0
    %414 = vmatprep.subr.mxu0 0.0
    %415 = vmatpush1.xpose.msra.mxu0 %v410
    %416 = vmatprep.subr.mxu0 0.0
    %417 = vmatpush1.xpose.msra.mxu0 %v412
    %418 = vmatprep.subr.mxu0 0.0
    %419 = vmatpush1.xpose.msra.mxu0 0.0
    %420 = vmatprep.subr.mxu0 0.0
    %421 = vmatpush1.xpose.msra.mxu0 0.0
    %422 = vmatprep.subr.mxu0 0.0
    %423 = vmatpush1.xpose.msra.mxu0 0.0
    %424 = vmatprep.subr.mxu0 0.0
    %425 = vmatpush1.xpose.msra.mxu0 0.0
    %426 = vmatprep.subr.mxu0 0.0
    %427 = vmatpush1.xpose.msra.mxu0 0.0
    %428 = vmatprep.subr.mxu0 0.0
    %429 = vmatpush1.xpose.msra.mxu0 0.0
    %430 = vmatprep.subr.mxu0 0.0
    %431 = vmatpush1.xpose.msra.mxu0 0.0
    %432 = vmatprep.subr.mxu0 0.0
    %433 = vmatpush1.xpose.msra.mxu0 0.0
    %434 = vmatprep.subr.mxu0 0.0
    %435 = vmatpush1.xpose.msra.mxu0 0.0
    %436 = vmatprep.subr.mxu0 0.0
    %437 = vmatpush1.xpose.msra.mxu0 0.0
    %438 = vmatprep.subr.mxu0 0.0
    %439 = vmatpush1.xpose.msra.mxu0 0.0
    %440 = vmatprep.subr.mxu0 0.0
    %441 = vmatpush1.xpose.msra.mxu0 0.0
    %442 = vmatprep.subr.mxu0 0.0
    %443 = vmatpush1.xpose.msra.mxu0 0.0
    %444 = vmatprep.subr.mxu0 0.0
    %445 = vmatpush1.xpose.msra.mxu0 0.0
    %446 = vmatprep.subr.mxu0 0.0
    %447 = vmatpush1.xpose.msra.mxu0 0.0
    %448 = vmatprep.subr.mxu0 0.0
    %449 = vmatpush1.xpose.msra.mxu0 0.0
    %450 = vmatprep.subr.mxu0 0.0
    %451 = vmatpush1.xpose.msra.mxu0 0.0
    %452 = vmatprep.subr.mxu0 0.0
    %453 = vmatpush1.xpose.msra.mxu0 0.0
    %454 = vmatprep.subr.mxu0 0.0
    %455 = vmatpush1.xpose.msra.mxu0 0.0
    %456 = vmatprep.subr.mxu0 0.0
    %457 = vmatpush1.xpose.msra.mxu0 0.0
    %458 = vmatprep.subr.mxu0 0.0
    %459 = vmatpush1.xpose.msra.mxu0 0.0
    %460 = vmatprep.subr.mxu0 0.0
    %461 = vmatpush1.xpose.msra.mxu0 0.0
    %462 = vmatprep.subr.mxu0 0.0
    %463 = vmatpush1.xpose.msra.mxu0 0.0
    %464 = vmatprep.subr.mxu0 0.0
    %465 = vmatpush1.xpose.msra.mxu0 0.0
    %466 = vmatprep.subr.mxu0 0.0
    %467 = vmatpush1.xpose.msra.mxu0 0.0
    %468 = vmatprep.subr.mxu0 0.0
    %469 = vmatpush1.xpose.msra.mxu0 0.0
    %470 = vmatprep.subr.mxu0 0.0
    %471 = vmatpush1.xpose.msra.mxu0 0.0
    %472 = vmatprep.subr.mxu0 0.0
    %473 = vmatpush1.xpose.msra.mxu0 0.0
    %474 = vmatprep.subr.mxu0 0.0
    %475 = vmatpush1.xpose.msra.mxu0 0.0
    %476 = vmatprep.subr.mxu0 0.0
    %477 = vmatpush1.xpose.msra.mxu0 0.0
    %478 = vmatprep.mubr.f32.mxu0 0.0
    %479 = vmatmul.mubr.f32.gmra.mrb[0].mxu0 %v406
    %v480 = vpop.f32.mrb[0].mxu0
    %v481 = vadd.f32 %v192, %v480
    %v482 = vpop.f32.mrb[0].mxu0
    %483 = vmatprep.mubr.f32.mxu0 0.0
    %484 = vmatmul.mubr.f32.gmra.mrb[0].mxu0 %v408
    %v485 = vpop.f32.mrb[0].mxu0
    %v486 = vadd.f32 %v193, %v485
    %v487 = vpop.f32.mrb[0].mxu0
    %488 = vdwg.mxu0
    %v489 = vsel %vm288, %v481, -inf
    %490 = vmax.xlane.f32.xlu0 %v489
    %v491 = vpop.xlane.xlu0 %490
    %v492 = vsel %vm288, %v486, -inf
    %493 = vmax.xlane.f32.xlu0 %v492
    %v494 = vpop.xlane.xlu0 %493
    %v495 = vsub.f32 %v481, %v491
    %v496 = vsub.f32 %v486, %v494
    %v497 = vmul.f32 %v495, 1.442695
    %v498 = vpow.pop %v497
    %v499 = vmul.f32 %v496, 1.442695
    %v500 = vpow.pop %v499
    %v501 = vsel %vm288, %v498, 0.0
    %502 = vadd.xlane.f32.xlu0 %v501
    %v503 = vpop.xlane.xlu0 %502
    %v504 = vsel %vm288, %v500, 0.0
    %505 = vadd.xlane.f32.xlu0 %v504
    %v506 = vpop.xlane.xlu0 %505
    %v507 = vrcp.pop %v503
    %v508 = vrcp.pop %v506
    %v509 = vmul.f32 %v498, %v507
    %v510 = vmul.f32 %v500, %v508
    %511 = vrot.lane.b32.xlu0 %v184, 56
    %v512 = vpop.permute.xlu0 %511
    %513 = vrot.lane.b32.xlu0 %v189, 56
    %v514 = vpop.permute.xlu0 %513
    %v518 = vsel %vm288, %v509, 0
    %v521 = vsel %vm288, %v510, 0
    %523 = vmatprep.subr.mxu0 0.0
    %524 = vmatpush1.msra.mxu0 %v512
    %525 = vmatprep.subr.mxu0 0.0
    %526 = vmatpush1.msra.mxu0 %v514
    %527 = vmatprep.subr.mxu0 0.0
    %528 = vmatpush1.msra.mxu0 0.0
    %529 = vmatprep.subr.mxu0 0.0
    %530 = vmatpush1.msra.mxu0 0.0
    %531 = vmatprep.subr.mxu0 0.0
    %532 = vmatpush1.msra.mxu0 0.0
    %533 = vmatprep.subr.mxu0 0.0
    %534 = vmatpush1.msra.mxu0 0.0
    %535 = vmatprep.subr.mxu0 0.0
    %536 = vmatpush1.msra.mxu0 0.0
    %537 = vmatprep.subr.mxu0 0.0
    %538 = vmatpush1.msra.mxu0 0.0
    %539 = vmatprep.subr.mxu0 0.0
    %540 = vmatpush1.msra.mxu0 0.0
    %541 = vmatprep.subr.mxu0 0.0
    %542 = vmatpush1.msra.mxu0 0.0
    %543 = vmatprep.subr.mxu0 0.0
    %544 = vmatpush1.msra.mxu0 0.0
    %545 = vmatprep.subr.mxu0 0.0
    %546 = vmatpush1.msra.mxu0 0.0
    %547 = vmatprep.subr.mxu0 0.0
    %548 = vmatpush1.msra.mxu0 0.0
    %549 = vmatprep.subr.mxu0 0.0
    %550 = vmatpush1.msra.mxu0 0.0
    %551 = vmatprep.subr.mxu0 0.0
    %552 = vmatpush1.msra.mxu0 0.0
    %553 = vmatprep.subr.mxu0 0.0
    %554 = vmatpush1.msra.mxu0 0.0
    %555 = vmatprep.subr.mxu0 0.0
    %556 = vmatpush1.msra.mxu0 0.0
    %557 = vmatprep.subr.mxu0 0.0
    %558 = vmatpush1.msra.mxu0 0.0
    %559 = vmatprep.subr.mxu0 0.0
    %560 = vmatpush1.msra.mxu0 0.0
    %561 = vmatprep.subr.mxu0 0.0
    %562 = vmatpush1.msra.mxu0 0.0
    %563 = vmatprep.subr.mxu0 0.0
    %564 = vmatpush1.msra.mxu0 0.0
    %565 = vmatprep.subr.mxu0 0.0
    %566 = vmatpush1.msra.mxu0 0.0
    %567 = vmatprep.subr.mxu0 0.0
    %568 = vmatpush1.msra.mxu0 0.0
    %569 = vmatprep.subr.mxu0 0.0
    %570 = vmatpush1.msra.mxu0 0.0
    %571 = vmatprep.subr.mxu0 0.0
    %572 = vmatpush1.msra.mxu0 0.0
    %573 = vmatprep.subr.mxu0 0.0
    %574 = vmatpush1.msra.mxu0 0.0
    %575 = vmatprep.subr.mxu0 0.0
    %576 = vmatpush1.msra.mxu0 0.0
    %577 = vmatprep.subr.mxu0 0.0
    %578 = vmatpush1.msra.mxu0 0.0
    %579 = vmatprep.subr.mxu0 0.0
    %580 = vmatpush1.msra.mxu0 0.0
    %581 = vmatprep.subr.mxu0 0.0
    %582 = vmatpush1.msra.mxu0 0.0
    %583 = vmatprep.subr.mxu0 0.0
    %584 = vmatpush1.msra.mxu0 0.0
    %585 = vmatprep.subr.mxu0 0.0
    %586 = vmatpush1.msra.mxu0 0.0
    %587 = vmatprep.mubr.f32.mxu0 0.0
    %588 = vmatmul.mubr.f32.gmra.mrb[0].mxu0 %v518
    %v589 = vpop.f32.mrb[0].mxu0
    %v590 = vadd.f32 0.0, %v589
    %v591 = vpop.f32.mrb[0].mxu0
    %592 = vmatprep.mubr.f32.mxu0 0.0
    %593 = vmatmul.mubr.f32.gmra.mrb[0].mxu0 %v521
    %v594 = vpop.f32.mrb[0].mxu0
    %v595 = vadd.f32 0.0, %v594
    %v596 = vpop.f32.mrb[0].mxu0
    %597 = vdwg.mxu0
    %v599 = vsel %vm204, %v590, 0
    %v602 = vsel %vm204, %v595, 0
    %604 = vmatprep.subr.mxu0 0.0
    %605 = vmatpush1.msra.mxu0 %v195
    %606 = vmatprep.subr.mxu0 0.0
    %607 = vmatpush1.msra.mxu0 0.0
    %608 = vmatprep.subr.mxu0 0.0
    %609 = vmatpush1.msra.mxu0 0.0
    %610 = vmatprep.subr.mxu0 0.0
    %611 = vmatpush1.msra.mxu0 0.0
    %612 = vmatprep.subr.mxu0 0.0
    %613 = vmatpush1.msra.mxu0 0.0
    %614 = vmatprep.subr.mxu0 0.0
    %615 = vmatpush1.msra.mxu0 0.0
    %616 = vmatprep.subr.mxu0 0.0
    %617 = vmatpush1.msra.mxu0 0.0
    %618 = vmatprep.subr.mxu0 0.0
    %619 = vmatpush1.msra.mxu0 0.0
    %620 = vmatprep.subr.mxu0 0.0
    %621 = vmatpush1.msra.mxu0 0.0
    %622 = vmatprep.subr.mxu0 0.0
    %623 = vmatpush1.msra.mxu0 0.0
    %624 = vmatprep.subr.mxu0 0.0
    %625 = vmatpush1.msra.mxu0 0.0
    %626 = vmatprep.subr.mxu0 0.0
    %627 = vmatpush1.msra.mxu0 0.0
    %628 = vmatprep.subr.mxu0 0.0
    %629 = vmatpush1.msra.mxu0 0.0
    %630 = vmatprep.subr.mxu0 0.0
    %631 = vmatpush1.msra.mxu0 0.0
    %632 = vmatprep.subr.mxu0 0.0
    %633 = vmatpush1.msra.mxu0 0.0
    %634 = vmatprep.subr.mxu0 0.0
    %635 = vmatpush1.msra.mxu0 0.0
    %636 = vmatprep.subr.mxu0 0.0
    %637 = vmatpush1.msra.mxu0 0.0
    %638 = vmatprep.subr.mxu0 0.0
    %639 = vmatpush1.msra.mxu0 0.0
    %640 = vmatprep.subr.mxu0 0.0
    %641 = vmatpush1.msra.mxu0 0.0
    %642 = vmatprep.subr.mxu0 0.0
    %643 = vmatpush1.msra.mxu0 0.0
    %644 = vmatprep.subr.mxu0 0.0
    %645 = vmatpush1.msra.mxu0 0.0
    %646 = vmatprep.subr.mxu0 0.0
    %647 = vmatpush1.msra.mxu0 0.0
    %648 = vmatprep.subr.mxu0 0.0
    %649 = vmatpush1.msra.mxu0 0.0
    %650 = vmatprep.subr.mxu0 0.0
    %651 = vmatpush1.msra.mxu0 0.0
    %652 = vmatprep.subr.mxu0 0.0
    %653 = vmatpush1.msra.mxu0 0.0
    %654 = vmatprep.subr.mxu0 0.0
    %655 = vmatpush1.msra.mxu0 0.0
    %656 = vmatprep.subr.mxu0 0.0
    %657 = vmatpush1.msra.mxu0 0.0
    %658 = vmatprep.subr.mxu0 0.0
    %659 = vmatpush1.msra.mxu0 0.0
    %660 = vmatprep.subr.mxu0 0.0
    %661 = vmatpush1.msra.mxu0 0.0
    %662 = vmatprep.subr.mxu0 0.0
    %663 = vmatpush1.msra.mxu0 0.0
    %664 = vmatprep.subr.mxu0 0.0
    %665 = vmatpush1.msra.mxu0 0.0
    %666 = vmatprep.subr.mxu0 0.0
    %667 = vmatpush1.msra.mxu0 0.0
    %668 = vmatprep.mubr.f32.mxu0 0.0
    %669 = vmatmul.mubr.f32.gmra.mrb[0].mxu0 %v599
    %v670 = vpop.f32.mrb[0].mxu0
    %v671 = vadd.f32 0.0, %v670
    %v672 = vpop.f32.mrb[0].mxu0
    %673 = vmatprep.mubr.f32.mxu0 0.0
    %674 = vmatmul.mubr.f32.gmra.mrb[0].mxu0 %v602
    %v675 = vpop.f32.mrb[0].mxu0
    %v676 = vadd.f32 0.0, %v675
    %v677 = vpop.f32.mrb[0].mxu0
    %678 = vdwg.mxu0
    %v680 = vsel %vm204, %v390, 0
    %v683 = vsel %vm204, %v395, 0
    %685 = vmatprep.subr.mxu0 0.0
    %686 = vmatpush1.msra.mxu0 %v194
    %687 = vmatprep.subr.mxu0 0.0
    %688 = vmatpush1.msra.mxu0 0.0
    %689 = vmatprep.subr.mxu0 0.0
    %690 = vmatpush1.msra.mxu0 0.0
    %691 = vmatprep.subr.mxu0 0.0
    %692 = vmatpush1.msra.mxu0 0.0
    %693 = vmatprep.subr.mxu0 0.0
    %694 = vmatpush1.msra.mxu0 0.0
    %695 = vmatprep.subr.mxu0 0.0
    %696 = vmatpush1.msra.mxu0 0.0
    %697 = vmatprep.subr.mxu0 0.0
    %698 = vmatpush1.msra.mxu0 0.0
    %699 = vmatprep.subr.mxu0 0.0
    %700 = vmatpush1.msra.mxu0 0.0
    %701 = vmatprep.subr.mxu0 0.0
    %702 = vmatpush1.msra.mxu0 0.0
    %703 = vmatprep.subr.mxu0 0.0
    %704 = vmatpush1.msra.mxu0 0.0
    %705 = vmatprep.subr.mxu0 0.0
    %706 = vmatpush1.msra.mxu0 0.0
    %707 = vmatprep.subr.mxu0 0.0
    %708 = vmatpush1.msra.mxu0 0.0
    %709 = vmatprep.subr.mxu0 0.0
    %710 = vmatpush1.msra.mxu0 0.0
    %711 = vmatprep.subr.mxu0 0.0
    %712 = vmatpush1.msra.mxu0 0.0
    %713 = vmatprep.subr.mxu0 0.0
    %714 = vmatpush1.msra.mxu0 0.0
    %715 = vmatprep.subr.mxu0 0.0
    %716 = vmatpush1.msra.mxu0 0.0
    %717 = vmatprep.subr.mxu0 0.0
    %718 = vmatpush1.msra.mxu0 0.0
    %719 = vmatprep.subr.mxu0 0.0
    %720 = vmatpush1.msra.mxu0 0.0
    %721 = vmatprep.subr.mxu0 0.0
    %722 = vmatpush1.msra.mxu0 0.0
    %723 = vmatprep.subr.mxu0 0.0
    %724 = vmatpush1.msra.mxu0 0.0
    %725 = vmatprep.subr.mxu0 0.0
    %726 = vmatpush1.msra.mxu0 0.0
    %727 = vmatprep.subr.mxu0 0.0
    %728 = vmatpush1.msra.mxu0 0.0
    %729 = vmatprep.subr.mxu0 0.0
    %730 = vmatpush1.msra.mxu0 0.0
    %731 = vmatprep.subr.mxu0 0.0
    %732 = vmatpush1.msra.mxu0 0.0
    %733 = vmatprep.subr.mxu0 0.0
    %734 = vmatpush1.msra.mxu0 0.0
    %735 = vmatprep.subr.mxu0 0.0
    %736 = vmatpush1.msra.mxu0 0.0
    %737 = vmatprep.subr.mxu0 0.0
    %738 = vmatpush1.msra.mxu0 0.0
    %739 = vmatprep.subr.mxu0 0.0
    %740 = vmatpush1.msra.mxu0 0.0
    %741 = vmatprep.subr.mxu0 0.0
    %742 = vmatpush1.msra.mxu0 0.0
    %743 = vmatprep.subr.mxu0 0.0
    %744 = vmatpush1.msra.mxu0 0.0
    %745 = vmatprep.subr.mxu0 0.0
    %746 = vmatpush1.msra.mxu0 0.0
    %747 = vmatprep.subr.mxu0 0.0
    %748 = vmatpush1.msra.mxu0 0.0
    %749 = vmatprep.mubr.f32.mxu0 0.0
    %750 = vmatmul.mubr.f32.gmra.mrb[0].mxu0 %v680
    %v751 = vpop.f32.mrb[0].mxu0
    %v752 = vadd.f32 %v671, %v751
    %v753 = vpop.f32.mrb[0].mxu0
    %754 = vmatprep.mubr.f32.mxu0 0.0
    %755 = vmatmul.mubr.f32.gmra.mrb[0].mxu0 %v683
    %v756 = vpop.f32.mrb[0].mxu0
    %v757 = vadd.f32 %v676, %v756
    %v758 = vpop.f32.mrb[0].mxu0
    %759 = vdwg.mxu0
    %760 = vrot.lane.b32.xlu0 %v184, 112
    %v761 = vpop.permute.xlu0 %760
    %762 = vrot.lane.b32.xlu0 %v189, 112
    %v763 = vpop.permute.xlu0 %762
    %764 = vrot.lane.b32.xlu0 %v184, 80
    %v765 = vpop.permute.xlu0 %764
    %766 = vrot.lane.b32.xlu0 %v189, 80
    %v767 = vpop.permute.xlu0 %766
    %v768 = vsel %vm204, %v761, 0
    %v770 = vsel %vm204, %v763, 0
    %v772 = vsel %vm204, %v765, 0
    %v774 = vsel %vm204, %v767, 0
    %776 = vmatprep.subr.mxu0 0.0
    %777 = vmatpush1.xpose.msra.mxu0 %v772
    %778 = vmatprep.subr.mxu0 0.0
    %779 = vmatpush1.xpose.msra.mxu0 %v774
    %780 = vmatprep.subr.mxu0 0.0
    %781 = vmatpush1.xpose.msra.mxu0 0.0
    %782 = vmatprep.subr.mxu0 0.0
    %783 = vmatpush1.xpose.msra.mxu0 0.0
    %784 = vmatprep.subr.mxu0 0.0
    %785 = vmatpush1.xpose.msra.mxu0 0.0
    %786 = vmatprep.subr.mxu0 0.0
    %787 = vmatpush1.xpose.msra.mxu0 0.0
    %788 = vmatprep.subr.mxu0 0.0
    %789 = vmatpush1.xpose.msra.mxu0 0.0
    %790 = vmatprep.subr.mxu0 0.0
    %791 = vmatpush1.xpose.msra.mxu0 0.0
    %792 = vmatprep.subr.mxu0 0.0
    %793 = vmatpush1.xpose.msra.mxu0 0.0
    %794 = vmatprep.subr.mxu0 0.0
    %795 = vmatpush1.xpose.msra.mxu0 0.0
    %796 = vmatprep.subr.mxu0 0.0
    %797 = vmatpush1.xpose.msra.mxu0 0.0
    %798 = vmatprep.subr.mxu0 0.0
    %799 = vmatpush1.xpose.msra.mxu0 0.0
    %800 = vmatprep.subr.mxu0 0.0
    %801 = vmatpush1.xpose.msra.mxu0 0.0
    %802 = vmatprep.subr.mxu0 0.0
    %803 = vmatpush1.xpose.msra.mxu0 0.0
    %804 = vmatprep.subr.mxu0 0.0
    %805 = vmatpush1.xpose.msra.mxu0 0.0
    %806 = vmatprep.subr.mxu0 0.0
    %807 = vmatpush1.xpose.msra.mxu0 0.0
    %808 = vmatprep.subr.mxu0 0.0
    %809 = vmatpush1.xpose.msra.mxu0 0.0
    %810 = vmatprep.subr.mxu0 0.0
    %811 = vmatpush1.xpose.msra.mxu0 0.0
    %812 = vmatprep.subr.mxu0 0.0
    %813 = vmatpush1.xpose.msra.mxu0 0.0
    %814 = vmatprep.subr.mxu0 0.0
    %815 = vmatpush1.xpose.msra.mxu0 0.0
    %816 = vmatprep.subr.mxu0 0.0
    %817 = vmatpush1.xpose.msra.mxu0 0.0
    %818 = vmatprep.subr.mxu0 0.0
    %819 = vmatpush1.xpose.msra.mxu0 0.0
    %820 = vmatprep.subr.mxu0 0.0
    %821 = vmatpush1.xpose.msra.mxu0 0.0
    %822 = vmatprep.subr.mxu0 0.0
    %823 = vmatpush1.xpose.msra.mxu0 0.0
    %824 = vmatprep.subr.mxu0 0.0
    %825 = vmatpush1.xpose.msra.mxu0 0.0
    %826 = vmatprep.subr.mxu0 0.0
    %827 = vmatpush1.xpose.msra.mxu0 0.0
    %828 = vmatprep.subr.mxu0 0.0
    %829 = vmatpush1.xpose.msra.mxu0 0.0
    %830 = vmatprep.subr.mxu0 0.0
    %831 = vmatpush1.xpose.msra.mxu0 0.0
    %832 = vmatprep.subr.mxu0 0.0
    %833 = vmatpush1.xpose.msra.mxu0 0.0
    %834 = vmatprep.subr.mxu0 0.0
    %835 = vmatpush1.xpose.msra.mxu0 0.0
    %836 = vmatprep.subr.mxu0 0.0
    %837 = vmatpush1.xpose.msra.mxu0 0.0
    %838 = vmatprep.subr.mxu0 0.0
    %839 = vmatpush1.xpose.msra.mxu0 0.0
    %840 = vmatprep.mubr.f32.mxu0 0.0
    %841 = vmatmul.mubr.f32.gmra.mrb[0].mxu0 %v768
    %v842 = vpop.f32.mrb[0].mxu0
    %v843 = vadd.f32 %v192, %v842
    %v844 = vpop.f32.mrb[0].mxu0
    %845 = vmatprep.mubr.f32.mxu0 0.0
    %846 = vmatmul.mubr.f32.gmra.mrb[0].mxu0 %v770
    %v847 = vpop.f32.mrb[0].mxu0
    %v848 = vadd.f32 %v193, %v847
    %v849 = vpop.f32.mrb[0].mxu0
    %850 = vdwg.mxu0
    %v851 = vsel %vm288, %v843, -inf
    %852 = vmax.xlane.f32.xlu0 %v851
    %v853 = vpop.xlane.xlu0 %852
    %v854 = vsel %vm288, %v848, -inf
    %855 = vmax.xlane.f32.xlu0 %v854
    %v856 = vpop.xlane.xlu0 %855
    %v857 = vsub.f32 %v843, %v853
    %v858 = vsub.f32 %v848, %v856
    %v859 = vmul.f32 %v857, 1.442695
    %v860 = vpow.pop %v859
    %v861 = vmul.f32 %v858, 1.442695
    %v862 = vpow.pop %v861
    %v863 = vsel %vm288, %v860, 0.0
    %864 = vadd.xlane.f32.xlu0 %v863
    %v865 = vpop.xlane.xlu0 %864
    %v866 = vsel %vm288, %v862, 0.0
    %867 = vadd.xlane.f32.xlu0 %v866
    %v868 = vpop.xlane.xlu0 %867
    %v869 = vrcp.pop %v865
    %v870 = vrcp.pop %v868
    %v871 = vmul.f32 %v860, %v869
    %v872 = vmul.f32 %v862, %v870
    %873 = vrot.lane.b32.xlu0 %v184, 48
    %v874 = vpop.permute.xlu0 %873
    %875 = vrot.lane.b32.xlu0 %v189, 48
    %v876 = vpop.permute.xlu0 %875
    %v880 = vsel %vm288, %v871, 0
    %v883 = vsel %vm288, %v872, 0
    %885 = vmatprep.subr.mxu0 0.0
    %886 = vmatpush1.msra.mxu0 %v874
    %887 = vmatprep.subr.mxu0 0.0
    %888 = vmatpush1.msra.mxu0 %v876
    %889 = vmatprep.subr.mxu0 0.0
    %890 = vmatpush1.msra.mxu0 0.0
    %891 = vmatprep.subr.mxu0 0.0
    %892 = vmatpush1.msra.mxu0 0.0
    %893 = vmatprep.subr.mxu0 0.0
    %894 = vmatpush1.msra.mxu0 0.0
    %895 = vmatprep.subr.mxu0 0.0
    %896 = vmatpush1.msra.mxu0 0.0
    %897 = vmatprep.subr.mxu0 0.0
    %898 = vmatpush1.msra.mxu0 0.0
    %899 = vmatprep.subr.mxu0 0.0
    %900 = vmatpush1.msra.mxu0 0.0
    %901 = vmatprep.subr.mxu0 0.0
    %902 = vmatpush1.msra.mxu0 0.0
    %903 = vmatprep.subr.mxu0 0.0
    %904 = vmatpush1.msra.mxu0 0.0
    %905 = vmatprep.subr.mxu0 0.0
    %906 = vmatpush1.msra.mxu0 0.0
    %907 = vmatprep.subr.mxu0 0.0
    %908 = vmatpush1.msra.mxu0 0.0
    %909 = vmatprep.subr.mxu0 0.0
    %910 = vmatpush1.msra.mxu0 0.0
    %911 = vmatprep.subr.mxu0 0.0
    %912 = vmatpush1.msra.mxu0 0.0
    %913 = vmatprep.subr.mxu0 0.0
    %914 = vmatpush1.msra.mxu0 0.0
    %915 = vmatprep.subr.mxu0 0.0
    %916 = vmatpush1.msra.mxu0 0.0
    %917 = vmatprep.subr.mxu0 0.0
    %918 = vmatpush1.msra.mxu0 0.0
    %919 = vmatprep.subr.mxu0 0.0
    %920 = vmatpush1.msra.mxu0 0.0
    %921 = vmatprep.subr.mxu0 0.0
    %922 = vmatpush1.msra.mxu0 0.0
    %923 = vmatprep.subr.mxu0 0.0
    %924 = vmatpush1.msra.mxu0 0.0
    %925 = vmatprep.subr.mxu0 0.0
    %926 = vmatpush1.msra.mxu0 0.0
    %927 = vmatprep.subr.mxu0 0.0
    %928 = vmatpush1.msra.mxu0 0.0
    %929 = vmatprep.subr.mxu0 0.0
    %930 = vmatpush1.msra.mxu0 0.0
    %931 = vmatprep.subr.mxu0 0.0
    %932 = vmatpush1.msra.mxu0 0.0
    %933 = vmatprep.subr.mxu0 0.0
    %934 = vmatpush1.msra.mxu0 0.0
    %935 = vmatprep.subr.mxu0 0.0
    %936 = vmatpush1.msra.mxu0 0.0
    %937 = vmatprep.subr.mxu0 0.0
    %938 = vmatpush1.msra.mxu0 0.0
    %939 = vmatprep.subr.mxu0 0.0
    %940 = vmatpush1.msra.mxu0 0.0
    %941 = vmatprep.subr.mxu0 0.0
    %942 = vmatpush1.msra.mxu0 0.0
    %943 = vmatprep.subr.mxu0 0.0
    %944 = vmatpush1.msra.mxu0 0.0
    %945 = vmatprep.subr.mxu0 0.0
    %946 = vmatpush1.msra.mxu0 0.0
    %947 = vmatprep.subr.mxu0 0.0
    %948 = vmatpush1.msra.mxu0 0.0
    %949 = vmatprep.mubr.f32.mxu0 0.0
    %950 = vmatmul.mubr.f32.gmra.mrb[0].mxu0 %v880
    %v951 = vpop.f32.mrb[0].mxu0
    %v952 = vadd.f32 0.0, %v951
    %v953 = vpop.f32.mrb[0].mxu0
    %954 = vmatprep.mubr.f32.mxu0 0.0
    %955 = vmatmul.mubr.f32.gmra.mrb[0].mxu0 %v883
    %v956 = vpop.f32.mrb[0].mxu0
    %v957 = vadd.f32 0.0, %v956
    %v958 = vpop.f32.mrb[0].mxu0
    %959 = vdwg.mxu0
    %v961 = vsel %vm204, %v952, 0
    %v964 = vsel %vm204, %v957, 0
    %966 = vmatprep.subr.mxu0 0.0
    %967 = vmatpush1.msra.mxu0 %v196
    %968 = vmatprep.subr.mxu0 0.0
    %969 = vmatpush1.msra.mxu0 0.0
    %970 = vmatprep.subr.mxu0 0.0
    %971 = vmatpush1.msra.mxu0 0.0
    %972 = vmatprep.subr.mxu0 0.0
    %973 = vmatpush1.msra.mxu0 0.0
    %974 = vmatprep.subr.mxu0 0.0
    %975 = vmatpush1.msra.mxu0 0.0
    %976 = vmatprep.subr.mxu0 0.0
    %977 = vmatpush1.msra.mxu0 0.0
    %978 = vmatprep.subr.mxu0 0.0
    %979 = vmatpush1.msra.mxu0 0.0
    %980 = vmatprep.subr.mxu0 0.0
    %981 = vmatpush1.msra.mxu0 0.0
    %982 = vmatprep.subr.mxu0 0.0
    %983 = vmatpush1.msra.mxu0 0.0
    %984 = vmatprep.subr.mxu0 0.0
    %985 = vmatpush1.msra.mxu0 0.0
    %986 = vmatprep.subr.mxu0 0.0
    %987 = vmatpush1.msra.mxu0 0.0
    %988 = vmatprep.subr.mxu0 0.0
    %989 = vmatpush1.msra.mxu0 0.0
    %990 = vmatprep.subr.mxu0 0.0
    %991 = vmatpush1.msra.mxu0 0.0
    %992 = vmatprep.subr.mxu0 0.0
    %993 = vmatpush1.msra.mxu0 0.0
    %994 = vmatprep.subr.mxu0 0.0
    %995 = vmatpush1.msra.mxu0 0.0
    %996 = vmatprep.subr.mxu0 0.0
    %997 = vmatpush1.msra.mxu0 0.0
    %998 = vmatprep.subr.mxu0 0.0
    %999 = vmatpush1.msra.mxu0 0.0
    %1000 = vmatprep.subr.mxu0 0.0
    %1001 = vmatpush1.msra.mxu0 0.0
    %1002 = vmatprep.subr.mxu0 0.0
    %1003 = vmatpush1.msra.mxu0 0.0
    %1004 = vmatprep.subr.mxu0 0.0
    %1005 = vmatpush1.msra.mxu0 0.0
    %1006 = vmatprep.subr.mxu0 0.0
    %1007 = vmatpush1.msra.mxu0 0.0
    %1008 = vmatprep.subr.mxu0 0.0
    %1009 = vmatpush1.msra.mxu0 0.0
    %1010 = vmatprep.subr.mxu0 0.0
    %1011 = vmatpush1.msra.mxu0 0.0
    %1012 = vmatprep.subr.mxu0 0.0
    %1013 = vmatpush1.msra.mxu0 0.0
    %1014 = vmatprep.subr.mxu0 0.0
    %1015 = vmatpush1.msra.mxu0 0.0
    %1016 = vmatprep.subr.mxu0 0.0
    %1017 = vmatpush1.msra.mxu0 0.0
    %1018 = vmatprep.subr.mxu0 0.0
    %1019 = vmatpush1.msra.mxu0 0.0
    %1020 = vmatprep.subr.mxu0 0.0
    %1021 = vmatpush1.msra.mxu0 0.0
    %1022 = vmatprep.subr.mxu0 0.0
    %1023 = vmatpush1.msra.mxu0 0.0
    %1024 = vmatprep.subr.mxu0 0.0
    %1025 = vmatpush1.msra.mxu0 0.0
    %1026 = vmatprep.subr.mxu0 0.0
    %1027 = vmatpush1.msra.mxu0 0.0
    %1028 = vmatprep.subr.mxu0 0.0
    %1029 = vmatpush1.msra.mxu0 0.0
    %1030 = vmatprep.mubr.f32.mxu0 0.0
    %1031 = vmatmul.mubr.f32.gmra.mrb[0].mxu0 %v961
    %v1032 = vpop.f32.mrb[0].mxu0
    %v1033 = vadd.f32 0.0, %v1032
    %v1034 = vpop.f32.mrb[0].mxu0
    %1035 = vmatprep.mubr.f32.mxu0 0.0
    %1036 = vmatmul.mubr.f32.gmra.mrb[0].mxu0 %v964
    %v1037 = vpop.f32.mrb[0].mxu0
    %v1038 = vadd.f32 0.0, %v1037
    %v1039 = vpop.f32.mrb[0].mxu0
    %1040 = vdwg.mxu0
    %v1041 = vadd.f32 %v752, %v1033
    %v1042 = vadd.f32 %v757, %v1038
    %1043 = vrot.lane.b32.xlu0 %v184, 104
    %v1044 = vpop.permute.xlu0 %1043
    %1045 = vrot.lane.b32.xlu0 %v189, 104
    %v1046 = vpop.permute.xlu0 %1045
    %1047 = vrot.lane.b32.xlu0 %v184, 72
    %v1048 = vpop.permute.xlu0 %1047
    %1049 = vrot.lane.b32.xlu0 %v189, 72
    %v1050 = vpop.permute.xlu0 %1049
    %v1051 = vsel %vm204, %v1044, 0
    %v1053 = vsel %vm204, %v1046, 0
    %v1055 = vsel %vm204, %v1048, 0
    %v1057 = vsel %vm204, %v1050, 0
    %1059 = vmatprep.subr.mxu0 0.0
    %1060 = vmatpush1.xpose.msra.mxu0 %v1055
    %1061 = vmatprep.subr.mxu0 0.0
    %1062 = vmatpush1.xpose.msra.mxu0 %v1057
    %1063 = vmatprep.subr.mxu0 0.0
    %1064 = vmatpush1.xpose.msra.mxu0 0.0
    %1065 = vmatprep.subr.mxu0 0.0
    %1066 = vmatpush1.xpose.msra.mxu0 0.0
    %1067 = vmatprep.subr.mxu0 0.0
    %1068 = vmatpush1.xpose.msra.mxu0 0.0
    %1069 = vmatprep.subr.mxu0 0.0
    %1070 = vmatpush1.xpose.msra.mxu0 0.0
    %1071 = vmatprep.subr.mxu0 0.0
    %1072 = vmatpush1.xpose.msra.mxu0 0.0
    %1073 = vmatprep.subr.mxu0 0.0
    %1074 = vmatpush1.xpose.msra.mxu0 0.0
    %1075 = vmatprep.subr.mxu0 0.0
    %1076 = vmatpush1.xpose.msra.mxu0 0.0
    %1077 = vmatprep.subr.mxu0 0.0
    %1078 = vmatpush1.xpose.msra.mxu0 0.0
    %1079 = vmatprep.subr.mxu0 0.0
    %1080 = vmatpush1.xpose.msra.mxu0 0.0
    %1081 = vmatprep.subr.mxu0 0.0
    %1082 = vmatpush1.xpose.msra.mxu0 0.0
    %1083 = vmatprep.subr.mxu0 0.0
    %1084 = vmatpush1.xpose.msra.mxu0 0.0
    %1085 = vmatprep.subr.mxu0 0.0
    %1086 = vmatpush1.xpose.msra.mxu0 0.0
    %1087 = vmatprep.subr.mxu0 0.0
    %1088 = vmatpush1.xpose.msra.mxu0 0.0
    %1089 = vmatprep.subr.mxu0 0.0
    %1090 = vmatpush1.xpose.msra.mxu0 0.0
    %1091 = vmatprep.subr.mxu0 0.0
    %1092 = vmatpush1.xpose.msra.mxu0 0.0
    %1093 = vmatprep.subr.mxu0 0.0
    %1094 = vmatpush1.xpose.msra.mxu0 0.0
    %1095 = vmatprep.subr.mxu0 0.0
    %1096 = vmatpush1.xpose.msra.mxu0 0.0
    %1097 = vmatprep.subr.mxu0 0.0
    %1098 = vmatpush1.xpose.msra.mxu0 0.0
    %1099 = vmatprep.subr.mxu0 0.0
    %1100 = vmatpush1.xpose.msra.mxu0 0.0
    %1101 = vmatprep.subr.mxu0 0.0
    %1102 = vmatpush1.xpose.msra.mxu0 0.0
    %1103 = vmatprep.subr.mxu0 0.0
    %1104 = vmatpush1.xpose.msra.mxu0 0.0
    %1105 = vmatprep.subr.mxu0 0.0
    %1106 = vmatpush1.xpose.msra.mxu0 0.0
    %1107 = vmatprep.subr.mxu0 0.0
    %1108 = vmatpush1.xpose.msra.mxu0 0.0
    %1109 = vmatprep.subr.mxu0 0.0
    %1110 = vmatpush1.xpose.msra.mxu0 0.0
    %1111 = vmatprep.subr.mxu0 0.0
    %1112 = vmatpush1.xpose.msra.mxu0 0.0
    %1113 = vmatprep.subr.mxu0 0.0
    %1114 = vmatpush1.xpose.msra.mxu0 0.0
    %1115 = vmatprep.subr.mxu0 0.0
    %1116 = vmatpush1.xpose.msra.mxu0 0.0
    %1117 = vmatprep.subr.mxu0 0.0
    %1118 = vmatpush1.xpose.msra.mxu0 0.0
    %1119 = vmatprep.subr.mxu0 0.0
    %1120 = vmatpush1.xpose.msra.mxu0 0.0
    %1121 = vmatprep.subr.mxu0 0.0
    %1122 = vmatpush1.xpose.msra.mxu0 0.0
    %1123 = vmatprep.mubr.f32.mxu0 0.0
    %1124 = vmatmul.mubr.f32.gmra.mrb[0].mxu0 %v1051
    %v1125 = vpop.f32.mrb[0].mxu0
    %v1126 = vadd.f32 %v192, %v1125
    %v1127 = vpop.f32.mrb[0].mxu0
    %1128 = vmatprep.mubr.f32.mxu0 0.0
    %1129 = vmatmul.mubr.f32.gmra.mrb[0].mxu0 %v1053
    %v1130 = vpop.f32.mrb[0].mxu0
    %v1131 = vadd.f32 %v193, %v1130
    %v1132 = vpop.f32.mrb[0].mxu0
    %1133 = vdwg.mxu0
    %v1134 = vsel %vm288, %v1126, -inf
    %1135 = vmax.xlane.f32.xlu0 %v1134
    %v1136 = vpop.xlane.xlu0 %1135
    %v1137 = vsel %vm288, %v1131, -inf
    %1138 = vmax.xlane.f32.xlu0 %v1137
    %v1139 = vpop.xlane.xlu0 %1138
    %v1140 = vsub.f32 %v1126, %v1136
    %v1141 = vsub.f32 %v1131, %v1139
    %v1142 = vmul.f32 %v1140, 1.442695
    %v1143 = vpow.pop %v1142
    %v1144 = vmul.f32 %v1141, 1.442695
    %v1145 = vpow.pop %v1144
    %v1146 = vsel %vm288, %v1143, 0.0
    %1147 = vadd.xlane.f32.xlu0 %v1146
    %v1148 = vpop.xlane.xlu0 %1147
    %v1149 = vsel %vm288, %v1145, 0.0
    %1150 = vadd.xlane.f32.xlu0 %v1149
    %v1151 = vpop.xlane.xlu0 %1150
    %v1152 = vrcp.pop %v1148
    %v1153 = vrcp.pop %v1151
    %v1154 = vmul.f32 %v1143, %v1152
    %v1155 = vmul.f32 %v1145, %v1153
    %1156 = vrot.lane.b32.xlu0 %v184, 40
    %v1157 = vpop.permute.xlu0 %1156
    %1158 = vrot.lane.b32.xlu0 %v189, 40
    %v1159 = vpop.permute.xlu0 %1158
    %v1163 = vsel %vm288, %v1154, 0
    %v1166 = vsel %vm288, %v1155, 0
    %1168 = vmatprep.subr.mxu0 0.0
    %1169 = vmatpush1.msra.mxu0 %v1157
    %1170 = vmatprep.subr.mxu0 0.0
    %1171 = vmatpush1.msra.mxu0 %v1159
    %1172 = vmatprep.subr.mxu0 0.0
    %1173 = vmatpush1.msra.mxu0 0.0
    %1174 = vmatprep.subr.mxu0 0.0
    %1175 = vmatpush1.msra.mxu0 0.0
    %1176 = vmatprep.subr.mxu0 0.0
    %1177 = vmatpush1.msra.mxu0 0.0
    %1178 = vmatprep.subr.mxu0 0.0
    %1179 = vmatpush1.msra.mxu0 0.0
    %1180 = vmatprep.subr.mxu0 0.0
    %1181 = vmatpush1.msra.mxu0 0.0
    %1182 = vmatprep.subr.mxu0 0.0
    %1183 = vmatpush1.msra.mxu0 0.0
    %1184 = vmatprep.subr.mxu0 0.0
    %1185 = vmatpush1.msra.mxu0 0.0
    %1186 = vmatprep.subr.mxu0 0.0
    %1187 = vmatpush1.msra.mxu0 0.0
    %1188 = vmatprep.subr.mxu0 0.0
    %1189 = vmatpush1.msra.mxu0 0.0
    %1190 = vmatprep.subr.mxu0 0.0
    %1191 = vmatpush1.msra.mxu0 0.0
    %1192 = vmatprep.subr.mxu0 0.0
    %1193 = vmatpush1.msra.mxu0 0.0
    %1194 = vmatprep.subr.mxu0 0.0
    %1195 = vmatpush1.msra.mxu0 0.0
    %1196 = vmatprep.subr.mxu0 0.0
    %1197 = vmatpush1.msra.mxu0 0.0
    %1198 = vmatprep.subr.mxu0 0.0
    %1199 = vmatpush1.msra.mxu0 0.0
    %1200 = vmatprep.subr.mxu0 0.0
    %1201 = vmatpush1.msra.mxu0 0.0
    %1202 = vmatprep.subr.mxu0 0.0
    %1203 = vmatpush1.msra.mxu0 0.0
    %1204 = vmatprep.subr.mxu0 0.0
    %1205 = vmatpush1.msra.mxu0 0.0
    %1206 = vmatprep.subr.mxu0 0.0
    %1207 = vmatpush1.msra.mxu0 0.0
    %1208 = vmatprep.subr.mxu0 0.0
    %1209 = vmatpush1.msra.mxu0 0.0
    %1210 = vmatprep.subr.mxu0 0.0
    %1211 = vmatpush1.msra.mxu0 0.0
    %1212 = vmatprep.subr.mxu0 0.0
    %1213 = vmatpush1.msra.mxu0 0.0
    %1214 = vmatprep.subr.mxu0 0.0
    %1215 = vmatpush1.msra.mxu0 0.0
    %1216 = vmatprep.subr.mxu0 0.0
    %1217 = vmatpush1.msra.mxu0 0.0
    %1218 = vmatprep.subr.mxu0 0.0
    %1219 = vmatpush1.msra.mxu0 0.0
    %1220 = vmatprep.subr.mxu0 0.0
    %1221 = vmatpush1.msra.mxu0 0.0
    %1222 = vmatprep.subr.mxu0 0.0
    %1223 = vmatpush1.msra.mxu0 0.0
    %1224 = vmatprep.subr.mxu0 0.0
    %1225 = vmatpush1.msra.mxu0 0.0
    %1226 = vmatprep.subr.mxu0 0.0
    %1227 = vmatpush1.msra.mxu0 0.0
    %1228 = vmatprep.subr.mxu0 0.0
    %1229 = vmatpush1.msra.mxu0 0.0
    %1230 = vmatprep.subr.mxu0 0.0
    %1231 = vmatpush1.msra.mxu0 0.0
    %1232 = vmatprep.mubr.f32.mxu0 0.0
    %1233 = vmatmul.mubr.f32.gmra.mrb[0].mxu0 %v1163
    %v1234 = vpop.f32.mrb[0].mxu0
    %v1235 = vadd.f32 0.0, %v1234
    %v1236 = vpop.f32.mrb[0].mxu0
    %1237 = vmatprep.mubr.f32.mxu0 0.0
    %1238 = vmatmul.mubr.f32.gmra.mrb[0].mxu0 %v1166
    %v1239 = vpop.f32.mrb[0].mxu0
    %v1240 = vadd.f32 0.0, %v1239
    %v1241 = vpop.f32.mrb[0].mxu0
    %1242 = vdwg.mxu0
    %v1244 = vsel %vm204, %v1235, 0
    %v1247 = vsel %vm204, %v1240, 0
    %1249 = vmatprep.subr.mxu0 0.0
    %1250 = vmatpush1.msra.mxu0 %v197
    %1251 = vmatprep.subr.mxu0 0.0
    %1252 = vmatpush1.msra.mxu0 0.0
    %1253 = vmatprep.subr.mxu0 0.0
    %1254 = vmatpush1.msra.mxu0 0.0
    %1255 = vmatprep.subr.mxu0 0.0
    %1256 = vmatpush1.msra.mxu0 0.0
    %1257 = vmatprep.subr.mxu0 0.0
    %1258 = vmatpush1.msra.mxu0 0.0
    %1259 = vmatprep.subr.mxu0 0.0
    %1260 = vmatpush1.msra.mxu0 0.0
    %1261 = vmatprep.subr.mxu0 0.0
    %1262 = vmatpush1.msra.mxu0 0.0
    %1263 = vmatprep.subr.mxu0 0.0
    %1264 = vmatpush1.msra.mxu0 0.0
    %1265 = vmatprep.subr.mxu0 0.0
    %1266 = vmatpush1.msra.mxu0 0.0
    %1267 = vmatprep.subr.mxu0 0.0
    %1268 = vmatpush1.msra.mxu0 0.0
    %1269 = vmatprep.subr.mxu0 0.0
    %1270 = vmatpush1.msra.mxu0 0.0
    %1271 = vmatprep.subr.mxu0 0.0
    %1272 = vmatpush1.msra.mxu0 0.0
    %1273 = vmatprep.subr.mxu0 0.0
    %1274 = vmatpush1.msra.mxu0 0.0
    %1275 = vmatprep.subr.mxu0 0.0
    %1276 = vmatpush1.msra.mxu0 0.0
    %1277 = vmatprep.subr.mxu0 0.0
    %1278 = vmatpush1.msra.mxu0 0.0
    %1279 = vmatprep.subr.mxu0 0.0
    %1280 = vmatpush1.msra.mxu0 0.0
    %1281 = vmatprep.subr.mxu0 0.0
    %1282 = vmatpush1.msra.mxu0 0.0
    %1283 = vmatprep.subr.mxu0 0.0
    %1284 = vmatpush1.msra.mxu0 0.0
    %1285 = vmatprep.subr.mxu0 0.0
    %1286 = vmatpush1.msra.mxu0 0.0
    %1287 = vmatprep.subr.mxu0 0.0
    %1288 = vmatpush1.msra.mxu0 0.0
    %1289 = vmatprep.subr.mxu0 0.0
    %1290 = vmatpush1.msra.mxu0 0.0
    %1291 = vmatprep.subr.mxu0 0.0
    %1292 = vmatpush1.msra.mxu0 0.0
    %1293 = vmatprep.subr.mxu0 0.0
    %1294 = vmatpush1.msra.mxu0 0.0
    %1295 = vmatprep.subr.mxu0 0.0
    %1296 = vmatpush1.msra.mxu0 0.0
    %1297 = vmatprep.subr.mxu0 0.0
    %1298 = vmatpush1.msra.mxu0 0.0
    %1299 = vmatprep.subr.mxu0 0.0
    %1300 = vmatpush1.msra.mxu0 0.0
    %1301 = vmatprep.subr.mxu0 0.0
    %1302 = vmatpush1.msra.mxu0 0.0
    %1303 = vmatprep.subr.mxu0 0.0
    %1304 = vmatpush1.msra.mxu0 0.0
    %1305 = vmatprep.subr.mxu0 0.0
    %1306 = vmatpush1.msra.mxu0 0.0
    %1307 = vmatprep.subr.mxu0 0.0
    %1308 = vmatpush1.msra.mxu0 0.0
    %1309 = vmatprep.subr.mxu0 0.0
    %1310 = vmatpush1.msra.mxu0 0.0
    %1311 = vmatprep.subr.mxu0 0.0
    %1312 = vmatpush1.msra.mxu0 0.0
    %1313 = vmatprep.mubr.f32.mxu0 0.0
    %1314 = vmatmul.mubr.f32.gmra.mrb[0].mxu0 %v1244
    %v1315 = vpop.f32.mrb[0].mxu0
    %v1316 = vadd.f32 0.0, %v1315
    %v1317 = vpop.f32.mrb[0].mxu0
    %1318 = vmatprep.mubr.f32.mxu0 0.0
    %1319 = vmatmul.mubr.f32.gmra.mrb[0].mxu0 %v1247
    %v1320 = vpop.f32.mrb[0].mxu0
    %v1321 = vadd.f32 0.0, %v1320
    %v1322 = vpop.f32.mrb[0].mxu0
    %1323 = vdwg.mxu0
    %v1324 = vadd.f32 %v1041, %v1316
    %v1325 = vadd.f32 %v1042, %v1321
    %v1326 = vadd.f32 %v56, %v1324
    %v1327 = vadd.f32 %v57, %v1325
    %1328 = vrot.lane.b32.xlu0 %v109, 32
    %v1329 = vpop.permute.xlu0 %1328
    %v1331 = vadd.f32 %v1326, %v1329
    %v1332 = vadd.f32 %v1327, %v1329
    %v1333 = vld [vmem:[#allocation5 + $0x2] sm:$0x1]
    %v1334 = vld [vmem:[#allocation5 + $0x3] sm:$0x1]
    %v1335 = vsel %vm60, %v1331, 0.0
    %1336 = vadd.xlane.f32.xlu0 %v1335
    %v1337 = vpop.xlane.xlu0 %1336
    %v1338 = vsel %vm60, %v1332, 0.0
    %1339 = vadd.xlane.f32.xlu0 %v1338
    %v1340 = vpop.xlane.xlu0 %1339
    %v1341 = vmul.f32 %v1337, %v67
    %v1342 = vmul.f32 %v1340, %v67
    %v1343 = vsub.f32 %v1331, %v1341
    %v1344 = vsub.f32 %v1332, %v1342
    %v1345 = vmul.f32 %v1343, %v1343
    %v1346 = vmul.f32 %v1344, %v1344
    %v1347 = vsel %vm60, %v1345, 0.0
    %1348 = vadd.xlane.f32.xlu0 %v1347
    %v1349 = vpop.xlane.xlu0 %1348
    %v1350 = vsel %vm60, %v1346, 0.0
    %1351 = vadd.xlane.f32.xlu0 %v1350
    %v1352 = vpop.xlane.xlu0 %1351
    %v1353 = vmul.f32 %v1349, %v67
    %v1354 = vmul.f32 %v1352, %v67
    %v1355 = vadd.f32 %v1353, 1e-05
    %v1356 = vadd.f32 %v1354, 1e-05
    %v1357 = vrsqrt.pop %v1355
    %v1358 = vrsqrt.pop %v1356
    %v1359 = vmul.f32 %v1343, %v1357
    %v1360 = vmul.f32 %v1344, %v1358
    %v1361 = vlaneseq
    %v1362 = vshrl.u32 %v1361, 7
    %v1363 = vsub.s32 0, %v1362
    %v1364 = vrot.slane %v1333, %v1363
    %v1365 = vmul.f32 %v1359, %v1364
    %v1366 = vmul.f32 %v1360, %v1364
    %v1367 = vlaneseq
    %v1368 = vshrl.u32 %v1367, 7
    %v1369 = vsub.s32 0, %v1368
    %v1370 = vrot.slane %v1334, %v1369
    %v1371 = vadd.f32 %v1365, %v1370
    %v1372 = vadd.f32 %v1366, %v1370
    %v1373 = vld [vmem:[%s4] sm:$0xff]
    %v1374 = vld [vmem:[%s4 + $0x8] sm:$0xff]
    %v1375 = vld [vmem:[%s4 + $0x10] sm:$0xff]
    %v1376 = vld [vmem:[%s4 + $0x18] sm:$0xff]
    %v1377 = vld [vmem:[%s6 + $0x1] sm:$0x1]
    %v1379 = vlaneseq
    %v1380 = vshrl.u32 %v1379, 7
    %v1381 = vsub.s32 0, %v1380
    %v1382 = vrot.slane %v1377, %v1381
    %v1385 = vsel %vm60, %v1371, 0
    %v1388 = vsel %vm60, %v1372, 0
    %1390 = vmatprep.subr.mxu0 0.0
    %1391 = vmatpush1.msra.mxu0 %v1373
    %1392 = vmatprep.subr.mxu0 0.0
    %1393 = vmatpush1.msra.mxu0 %v1374
    %1394 = vmatprep.subr.mxu0 0.0
    %1395 = vmatpush1.msra.mxu0 %v1375
    %1396 = vmatprep.subr.mxu0 0.0
    %1397 = vmatpush1.msra.mxu0 %v1376
    %1398 = vmatprep.subr.mxu0 0.0
    %1399 = vmatpush1.msra.mxu0 0.0
    %1400 = vmatprep.subr.mxu0 0.0
    %1401 = vmatpush1.msra.mxu0 0.0
    %1402 = vmatprep.subr.mxu0 0.0
    %1403 = vmatpush1.msra.mxu0 0.0
    %1404 = vmatprep.subr.mxu0 0.0
    %1405 = vmatpush1.msra.mxu0 0.0
    %1406 = vmatprep.subr.mxu0 0.0
    %1407 = vmatpush1.msra.mxu0 0.0
    %1408 = vmatprep.subr.mxu0 0.0
    %1409 = vmatpush1.msra.mxu0 0.0
    %1410 = vmatprep.subr.mxu0 0.0
    %1411 = vmatpush1.msra.mxu0 0.0
    %1412 = vmatprep.subr.mxu0 0.0
    %1413 = vmatpush1.msra.mxu0 0.0
    %1414 = vmatprep.subr.mxu0 0.0
    %1415 = vmatpush1.msra.mxu0 0.0
    %1416 = vmatprep.subr.mxu0 0.0
    %1417 = vmatpush1.msra.mxu0 0.0
    %1418 = vmatprep.subr.mxu0 0.0
    %1419 = vmatpush1.msra.mxu0 0.0
    %1420 = vmatprep.subr.mxu0 0.0
    %1421 = vmatpush1.msra.mxu0 0.0
    %1422 = vmatprep.subr.mxu0 0.0
    %1423 = vmatpush1.msra.mxu0 0.0
    %1424 = vmatprep.subr.mxu0 0.0
    %1425 = vmatpush1.msra.mxu0 0.0
    %1426 = vmatprep.subr.mxu0 0.0
    %1427 = vmatpush1.msra.mxu0 0.0
    %1428 = vmatprep.subr.mxu0 0.0
    %1429 = vmatpush1.msra.mxu0 0.0
    %1430 = vmatprep.subr.mxu0 0.0
    %1431 = vmatpush1.msra.mxu0 0.0
    %1432 = vmatprep.subr.mxu0 0.0
    %1433 = vmatpush1.msra.mxu0 0.0
    %1434 = vmatprep.subr.mxu0 0.0
    %1435 = vmatpush1.msra.mxu0 0.0
    %1436 = vmatprep.subr.mxu0 0.0
    %1437 = vmatpush1.msra.mxu0 0.0
    %1438 = vmatprep.subr.mxu0 0.0
    %1439 = vmatpush1.msra.mxu0 0.0
    %1440 = vmatprep.subr.mxu0 0.0
    %1441 = vmatpush1.msra.mxu0 0.0
    %1442 = vmatprep.subr.mxu0 0.0
    %1443 = vmatpush1.msra.mxu0 0.0
    %1444 = vmatprep.subr.mxu0 0.0
    %1445 = vmatpush1.msra.mxu0 0.0
    %1446 = vmatprep.subr.mxu0 0.0
    %1447 = vmatpush1.msra.mxu0 0.0
    %1448 = vmatprep.subr.mxu0 0.0
    %1449 = vmatpush1.msra.mxu0 0.0
    %1450 = vmatprep.subr.mxu0 0.0
    %1451 = vmatpush1.msra.mxu0 0.0
    %1452 = vmatprep.subr.mxu0 0.0
    %1453 = vmatpush1.msra.mxu0 0.0
    %1454 = vmatprep.mubr.f32.mxu0 0.0
    %1455 = vmatmul.mubr.f32.gmra.mrb[0].mxu0 %v1385
    %v1456 = vpop.f32.mrb[0].mxu0
    %v1457 = vadd.f32 %v1382, %v1456
    %v1458 = vpop.f32.mrb[0].mxu0
    %1459 = vmatprep.mubr.f32.mxu0 0.0
    %1460 = vmatmul.mubr.f32.gmra.mrb[0].mxu0 %v1388
    %v1461 = vpop.f32.mrb[0].mxu0
    %v1462 = vadd.f32 %v1382, %v1461
    %v1463 = vpop.f32.mrb[0].mxu0
    %1464 = vdwg.mxu0
    %v1465 = vmul.f32 %v1457, 0.5
    %v1466 = vmul.f32 %v1462, 0.5
    %v1467 = vmul.f32 %v1457, 0.70710677
    %v1468 = vmul.f32 %v1462, 0.70710677
    %v1469 = verf.f32.pop %v1467
    %v1470 = verf.f32.pop %v1468
    %v1471 = vadd.f32 %v1469, 1.0
    %v1472 = vadd.f32 %v1470, 1.0
    %v1473 = vmul.f32 %v1465, %v1471
    %v1474 = vmul.f32 %v1466, %v1472
    %v1475 = vld [vmem:[%s5] sm:$0xff]
    %v1476 = vld [vmem:[%s5 + $0x8] sm:$0xff]
    %v1477 = vld [vmem:[%s5 + $0x10] sm:$0xff]
    %v1478 = vld [vmem:[%s5 + $0x18] sm:$0xff]
    %v1479 = vld [vmem:[%s5 + $0x20] sm:$0xff]
    %v1480 = vld [vmem:[%s5 + $0x28] sm:$0xff]
    %v1481 = vld [vmem:[%s5 + $0x30] sm:$0xff]
    %v1482 = vld [vmem:[%s5 + $0x38] sm:$0xff]
    %1483 = vrot.lane.b32.xlu0 %v1382, 64
    %v1484 = vpop.permute.xlu0 %1483
    %vm1486 = vcmask 523264
    %v1488 = vsel %vm1486, %v1473, 0
    %v1491 = vsel %vm1486, %v1474, 0
    %1493 = vmatprep.subr.mxu0 0.0
    %1494 = vmatpush1.msra.mxu0 %v1475
    %1495 = vmatprep.subr.mxu0 0.0
    %1496 = vmatpush1.msra.mxu0 %v1476
    %1497 = vmatprep.subr.mxu0 0.0
    %1498 = vmatpush1.msra.mxu0 %v1477
    %1499 = vmatprep.subr.mxu0 0.0
    %1500 = vmatpush1.msra.mxu0 %v1478
    %1501 = vmatprep.subr.mxu0 0.0
    %1502 = vmatpush1.msra.mxu0 %v1479
    %1503 = vmatprep.subr.mxu0 0.0
    %1504 = vmatpush1.msra.mxu0 %v1480
    %1505 = vmatprep.subr.mxu0 0.0
    %1506 = vmatpush1.msra.mxu0 %v1481
    %1507 = vmatprep.subr.mxu0 0.0
    %1508 = vmatpush1.msra.mxu0 %v1482
    %1509 = vmatprep.subr.mxu0 0.0
    %1510 = vmatpush1.msra.mxu0 0.0
    %1511 = vmatprep.subr.mxu0 0.0
    %1512 = vmatpush1.msra.mxu0 0.0
    %1513 = vmatprep.subr.mxu0 0.0
    %1514 = vmatpush1.msra.mxu0 0.0
    %1515 = vmatprep.subr.mxu0 0.0
    %1516 = vmatpush1.msra.mxu0 0.0
    %1517 = vmatprep.subr.mxu0 0.0
    %1518 = vmatpush1.msra.mxu0 0.0
    %1519 = vmatprep.subr.mxu0 0.0
    %1520 = vmatpush1.msra.mxu0 0.0
    %1521 = vmatprep.subr.mxu0 0.0
    %1522 = vmatpush1.msra.mxu0 0.0
    %1523 = vmatprep.subr.mxu0 0.0
    %1524 = vmatpush1.msra.mxu0 0.0
    %1525 = vmatprep.subr.mxu0 0.0
    %1526 = vmatpush1.msra.mxu0 0.0
    %1527 = vmatprep.subr.mxu0 0.0
    %1528 = vmatpush1.msra.mxu0 0.0
    %1529 = vmatprep.subr.mxu0 0.0
    %1530 = vmatpush1.msra.mxu0 0.0
    %1531 = vmatprep.subr.mxu0 0.0
    %1532 = vmatpush1.msra.mxu0 0.0
    %1533 = vmatprep.subr.mxu0 0.0
    %1534 = vmatpush1.msra.mxu0 0.0
    %1535 = vmatprep.subr.mxu0 0.0
    %1536 = vmatpush1.msra.mxu0 0.0
    %1537 = vmatprep.subr.mxu0 0.0
    %1538 = vmatpush1.msra.mxu0 0.0
    %1539 = vmatprep.subr.mxu0 0.0
    %1540 = vmatpush1.msra.mxu0 0.0
    %1541 = vmatprep.subr.mxu0 0.0
    %1542 = vmatpush1.msra.mxu0 0.0
    %1543 = vmatprep.subr.mxu0 0.0
    %1544 = vmatpush1.msra.mxu0 0.0
    %1545 = vmatprep.subr.mxu0 0.0
    %1546 = vmatpush1.msra.mxu0 0.0
    %1547 = vmatprep.subr.mxu0 0.0
    %1548 = vmatpush1.msra.mxu0 0.0
    %1549 = vmatprep.subr.mxu0 0.0
    %1550 = vmatpush1.msra.mxu0 0.0
    %1551 = vmatprep.subr.mxu0 0.0
    %1552 = vmatpush1.msra.mxu0 0.0
    %1553 = vmatprep.subr.mxu0 0.0
    %1554 = vmatpush1.msra.mxu0 0.0
    %1555 = vmatprep.subr.mxu0 0.0
    %1556 = vmatpush1.msra.mxu0 0.0
    %1557 = vmatprep.mubr.f32.mxu0 0.0
    %1558 = vmatmul.mubr.f32.gmra.mrb[0].mxu0 %v1488
    %v1559 = vpop.f32.mrb[0].mxu0
    %v1560 = vadd.f32 %v1484, %v1559
    %v1561 = vpop.f32.mrb[0].mxu0
    %1562 = vmatprep.mubr.f32.mxu0 0.0
    %1563 = vmatmul.mubr.f32.gmra.mrb[0].mxu0 %v1491
    %v1564 = vpop.f32.mrb[0].mxu0
    %v1565 = vadd.f32 %v1484, %v1564
    %v1566 = vpop.f32.mrb[0].mxu0
    %1567 = vdwg.mxu0
    %v1568 = vadd.f32 %v1331, %v1560
    %v1569 = vadd.f32 %v1332, %v1565
    %1570 = vst.msk [vmem:[#allocation7] sm:$0xff] %vm60, %v1568
    %1571 = vst.msk [vmem:[#allocation7 + $0x8] sm:$0xff] %vm60, %v1569
    // Predicated region
    $region42: #{tpu_custom_call.1} parent=1 // pred_check
      _
    $region43: #{tpu_custom_call.1} parent=1 // pred_check_branch
      %1573 = sbr.rel (0) target = $region45
    $region44: #{tpu_custom_call.1} parent=1 // pred_region
      %s1575 = ssub.s32 256, 256
      %1576 = vsyncadd [#allocation4], %s1575
      %s1577 = sshll.u32 [#allocation7], 4
      %s1578 = int_to_ptr.vmem [resolvable:$true] %s1577
      %1583 = dma.vmem_to_hbm [thread:$0]  %s1578, 256, %s8, [#allocation4], 128, 128, 8
    $region45: #{tpu_custom_call.1} parent=1 // pred_fallthru
      _
    // Predicated region
    $region46: #{tpu_custom_call.1} parent=1 // pred_check
      _
    $region47: #{tpu_custom_call.1} parent=1 // pred_check_branch
      %1585 = sbr.rel (0) target = $region49
    $region48: #{tpu_custom_call.1} parent=1 // pred_region
      %1586 = dma.done [#allocation4], 256
    $region49: #{tpu_custom_call.1} parent=1 // pred_fallthru
      _
    %1587 = vsyncpa [#allocation3], 1
    %1588 = vsyncpa [#allocation6], 1
    %1589 = vsyncpa [#allocation4], 1

</llo_original>
